<compile_context>
chip_gen: v7x
topology: tpu7x:2x2x1
jax: 0.10.0
libtpu: 0.0.40
codegen_flags: <defaults>
</compile_context>

<pallas_src>
import functools

import jax
import jax.numpy as jnp
from jax.experimental import pallas as pl
from jax.experimental.pallas import tpu as pltpu


# ---------------------------------------------------------------------------
# CondInstanceNorm
# ---------------------------------------------------------------------------
def _cond_instance_norm_kernel(x_ref, g_ref, b_ref, a_ref, o_ref, *, eps, C, HW):
    # x_ref/o_ref: (bt, C, HWp)  (HWp >= HW, zero padded);  g/b/a: (bt, C, 1)
    x = x_ref[...].astype(jnp.float32)
    gamma = g_ref[...].astype(jnp.float32)
    beta = b_ref[...].astype(jnp.float32)
    alpha = a_ref[...].astype(jnp.float32)

    # Single-pass per-channel spatial stats (zero padding adds nothing to sums).
    s1 = jnp.sum(x, axis=2, keepdims=True)                      # (bt, C, 1)
    s2 = jnp.sum(x * x, axis=2, keepdims=True)                  # (bt, C, 1)
    mu = s1 * (1.0 / HW)
    if HW > 1:
        # torch.var default is unbiased -> /(HW-1); clamp for f32 cancellation.
        var = jnp.maximum(s2 - HW * mu * mu, 0.0) * (1.0 / (HW - 1))
    else:
        var = jnp.zeros_like(mu)                                # guard HW == 1
    inv_sigma = jax.lax.rsqrt(var + eps)                        # EUP, (C,1)-wide only

    # Cross-channel stats of the per-channel means.
    m = jnp.mean(mu, axis=1, keepdims=True)                     # (bt, 1, 1)
    if C > 1:
        d = mu - m
        v = jnp.sum(d * d, axis=1, keepdims=True) * (1.0 / (C - 1))
        inv_s = jax.lax.rsqrt(v + eps)                          # (bt, 1, 1)
    else:
        inv_s = jnp.ones_like(m)

    # Fused affine: the ONLY (C, HW)-wide work is one mul and one add.
    scale = gamma * inv_sigma                                   # (bt, C, 1)
    bias = beta - mu * scale + alpha * (mu - m) * inv_s         # (bt, C, 1)
    o_ref[...] = (x * scale + bias).astype(o_ref.dtype)


def _pick_batch_tile(B, C, HWp, itemsize, max_block_bytes=2 << 20):
    """Largest divisor of B (<=8) whose block stays comfortably small."""
    bt = min(B, 8)
    while bt > 1 and (B % bt != 0 or bt * C * HWp * itemsize > max_block_bytes):
        bt -= 1
    return max(bt, 1)


def cond_instance_norm(x, noise_scale_idx, gamma, beta, alpha, eps=1e-5):
    """x: (B, C, H, W) NCHW; noise_scale_idx: (B,) int; gamma/beta/alpha: (n_scales, C)."""
    B, C, H, W = x.shape
    HW = H * W
    HWp = ((HW + 127) // 128) * 128        # lane-dense last dim
    itemsize = jnp.dtype(x.dtype).itemsize

    # Glue in plain JAX: reshape, zero-pad the spatial axis, gather per-batch params.
    x2 = x.reshape(B, C, HW)
    if HWp != HW:
        x2 = jnp.pad(x2, ((0, 0), (0, 0), (0, HWp - HW)))
    g = gamma[noise_scale_idx].reshape(B, C, 1)
    b = beta[noise_scale_idx].reshape(B, C, 1)
    a = alpha[noise_scale_idx].reshape(B, C, 1)

    bt = _pick_batch_tile(B, C, HWp, itemsize)
    grid = (B // bt,)
    block_bytes = bt * C * HWp * itemsize
    # in/out double-buffered + f32 intermediates + headroom; 32 MiB floor is safe
    # on every generation (v7x physical VMEM is 64 MiB, so cap there).
    vmem_limit = int(min(max(8 * block_bytes + (2 << 20), 32 * 1024 * 1024),
                         64 * 1024 * 1024))

    kernel = functools.partial(_cond_instance_norm_kernel, eps=eps, C=C, HW=HW)
    cost = pl.CostEstimate(
        flops=int(7 * B * C * HW),
        transcendentals=int(2 * B * C),
        bytes_accessed=int(2 * B * C * HWp * itemsize + 3 * B * C * itemsize),
    )

    out = pl.pallas_call(
        kernel,
        out_shape=jax.ShapeDtypeStruct((B, C, HWp), x.dtype),
        grid=grid,
        in_specs=[
            pl.BlockSpec((bt, C, HWp), lambda i: (i, 0, 0)),
            pl.BlockSpec((bt, C, 1), lambda i: (i, 0, 0)),
            pl.BlockSpec((bt, C, 1), lambda i: (i, 0, 0)),
            pl.BlockSpec((bt, C, 1), lambda i: (i, 0, 0)),
        ],
        out_specs=pl.BlockSpec((bt, C, HWp), lambda i: (i, 0, 0)),
        compiler_params=pltpu.CompilerParams(
            dimension_semantics=("parallel",),
            vmem_limit_bytes=vmem_limit,
        ),
        cost_estimate=cost,
    )(x2, g, b, a)

    if HWp != HW:
        out = out[:, :, :HW]
    return out.reshape(B, C, H, W)


# ---------------------------------------------------------------------------
# AvgPool2d(kernel=5, stride=1, padding=2)  (count_include_pad=True -> /25)
# ---------------------------------------------------------------------------
def _avg_pool5_kernel(x_ref, o_ref, rows_ref, *, H, W):
    # x_ref: (1, C, H+4, W+4) zero-padded; rows_ref scratch: (C, H, W+4); o_ref: (1, C, H, W)
    rows = x_ref[0, :, 0:H, :].astype(jnp.float32)
    for d in range(1, 5):                                   # separable: 5-tap row sum
        rows = rows + x_ref[0, :, d:d + H, :].astype(jnp.float32)
    rows_ref[...] = rows
    out = rows_ref[:, :, 0:W]
    for d in range(1, 5):                                   # then 5-tap column sum
        out = out + rows_ref[:, :, d:d + W]
    o_ref[0] = (out * (1.0 / 25.0)).astype(o_ref.dtype)


def avg_pool_5x5(x):
    B, C, H, W = x.shape
    xp = jnp.pad(x, ((0, 0), (0, 0), (2, 2), (2, 2)))
    Hp, Wp = H + 4, W + 4
    kernel = functools.partial(_avg_pool5_kernel, H=H, W=W)
    return pl.pallas_call(
        kernel,
        out_shape=jax.ShapeDtypeStruct((B, C, H, W), x.dtype),
        grid=(B,),
        in_specs=[pl.BlockSpec((1, C, Hp, Wp), lambda i: (i, 0, 0, 0))],
        out_specs=pl.BlockSpec((1, C, H, W), lambda i: (i, 0, 0, 0)),
        scratch_shapes=[pltpu.VMEM((C, H, Wp), jnp.float32)],
        compiler_params=pltpu.CompilerParams(dimension_semantics=("parallel",)),
    )(xp)


# ---------------------------------------------------------------------------
# Conv2d(C, C, kernel=3, padding='same')  as 9 shifted MXU matmuls per batch
# ---------------------------------------------------------------------------
def _conv3x3_kernel(x_ref, w_ref, b_ref, o_ref, *, Cout, HWp):
    # x_ref: (1, 9, Cin, HWp) tap stack; w_ref: (9, Cout, Cin); b_ref: (Cout, 1)
    acc = jnp.zeros((Cout, HWp), jnp.float32)
    for k in range(9):
        acc = acc + jnp.dot(w_ref[k].astype(jnp.float32),
                            x_ref[0, k].astype(jnp.float32),
                            preferred_element_type=jnp.float32)
    o_ref[0] = (acc + b_ref[...].astype(jnp.float32)).astype(o_ref.dtype)


def conv3x3_same(x, w, b):
    B, Cin, H, W = x.shape
    Cout = w.shape[0]
    HW = H * W
    HWp = ((HW + 127) // 128) * 128

    # Glue in plain JAX: pad + build the 9-tap stack (lane-dense flattened HW).
    xp = jnp.pad(x, ((0, 0), (0, 0), (1, 1), (1, 1)))
    taps = [xp[:, :, di:di + H, dj:dj + W].reshape(B, Cin, HW)
            for di in range(3) for dj in range(3)]
    xt = jnp.stack(taps, axis=1)                            # (B, 9, Cin, HW)
    if HWp != HW:
        xt = jnp.pad(xt, ((0, 0), (0, 0), (0, 0), (0, HWp - HW)))
    w9 = jnp.transpose(w, (2, 3, 0, 1)).reshape(9, Cout, Cin)
    b2 = b.reshape(Cout, 1)

    kernel = functools.partial(_conv3x3_kernel, Cout=Cout, HWp=HWp)
    out = pl.pallas_call(
        kernel,
        out_shape=jax.ShapeDtypeStruct((B, Cout, HWp), x.dtype),
        grid=(B,),
        in_specs=[
            pl.BlockSpec((1, 9, Cin, HWp), lambda i: (i, 0, 0, 0)),
            pl.BlockSpec((9, Cout, Cin), lambda i: (0, 0, 0)),
            pl.BlockSpec((Cout, 1), lambda i: (0, 0)),
        ],
        out_specs=pl.BlockSpec((1, Cout, HWp), lambda i: (i, 0, 0)),
        compiler_params=pltpu.CompilerParams(dimension_semantics=("parallel",)),
    )(xt, w9, b2)

    if HWp != HW:
        out = out[:, :, :HW]
    return out.reshape(B, Cout, H, W)


# ---------------------------------------------------------------------------
# ResidualPoolingBlock forward (norm1 -> pool -> norm2 -> conv; no skip add,
# matching the reference module exactly)
# ---------------------------------------------------------------------------
def residual_pooling_block(x, noise_scale_idx,
                           gamma1, beta1, alpha1,
                           gamma2, beta2, alpha2,
                           conv_w, conv_b, eps=1e-5):
    h = cond_instance_norm(x, noise_scale_idx, gamma1, beta1, alpha1, eps)
    h = avg_pool_5x5(h)
    h = cond_instance_norm(h, noise_scale_idx, gamma2, beta2, alpha2, eps)
    h = conv3x3_same(h, conv_w, conv_b)
    return h


# ---------------------------------------------------------------------------
# Pure-JAX reference
# ---------------------------------------------------------------------------
def _cond_instance_norm_ref(x, idx, gamma, beta, alpha, eps=1e-5):
    B, C, H, W = x.shape
    g = gamma[idx].reshape(B, C, 1, 1)
    b = beta[idx].reshape(B, C, 1, 1)
    a = alpha[idx].reshape(B, C, 1, 1)
    mu = x.mean(axis=(2, 3), keepdims=True)
    var = x.var(axis=(2, 3), keepdims=True, ddof=1)
    xh = (x - mu) / jnp.sqrt(var + eps)
    out = g * xh + b
    m = mu.mean(axis=1, keepdims=True)
    if C == 1:
        s = jnp.ones_like(mu)
    else:
        s = jnp.sqrt(mu.var(axis=1, keepdims=True, ddof=1) + eps)
    return out + a * (mu - m) / s


def _avg_pool5_ref(x):
    xp = jnp.pad(x, ((0, 0), (0, 0), (2, 2), (2, 2)))
    s = jax.lax.reduce_window(xp, jnp.array(0.0, x.dtype), jax.lax.add,
                              (1, 1, 5, 5), (1, 1, 1, 1), "VALID")
    return s / 25.0


def _conv3x3_ref(x, w, b):
    y = jax.lax.conv_general_dilated(
        x, w, window_strides=(1, 1), padding="SAME",
        dimension_numbers=("NCHW", "OIHW", "NCHW"),
        precision=jax.lax.Precision.HIGHEST)
    return y + b.reshape(1, -1, 1, 1)


def _reference_block(x, idx, gamma1, beta1, alpha1, gamma2, beta2, alpha2,
                     conv_w, conv_b, eps=1e-5):
    h = _cond_instance_norm_ref(x, idx, gamma1, beta1, alpha1, eps)
    h = _avg_pool5_ref(h)
    h = _cond_instance_norm_ref(h, idx, gamma2, beta2, alpha2, eps)
    h = _conv3x3_ref(h, conv_w, conv_b)
    return h


if __name__ == "__main__":
    key = jax.random.PRNGKey(0)
    keys = jax.random.split(key, 10)

    B, C, H, W = 2, 4, 16, 16
    n_noise_scale = 10
    eps = 1e-5

    x = jax.random.normal(keys[0], (B, C, H, W), dtype=jnp.float32)
    noise_scale_idx = jax.random.randint(keys[1], (B,), 0, n_noise_scale)

    gamma1 = 1.0 + 0.1 * jax.random.normal(keys[2], (n_noise_scale, C), jnp.float32)
    beta1 = 0.1 * jax.random.normal(keys[3], (n_noise_scale, C), jnp.float32)
    alpha1 = 0.1 * jax.random.normal(keys[4], (n_noise_scale, C), jnp.float32)
    gamma2 = 1.0 + 0.1 * jax.random.normal(keys[5], (n_noise_scale, C), jnp.float32)
    beta2 = 0.1 * jax.random.normal(keys[6], (n_noise_scale, C), jnp.float32)
    alpha2 = 0.1 * jax.random.normal(keys[7], (n_noise_scale, C), jnp.float32)
    conv_w = 0.1 * jax.random.normal(keys[8], (C, C, 3, 3), jnp.float32)
    conv_b = 0.1 * jax.random.normal(keys[9], (C,), jnp.float32)

    block_fn = jax.jit(functools.partial(residual_pooling_block, eps=eps))
    out = block_fn(x, noise_scale_idx, gamma1, beta1, alpha1,
                   gamma2, beta2, alpha2, conv_w, conv_b)
    out = jax.block_until_ready(out)

    ref = _reference_block(x, noise_scale_idx, gamma1, beta1, alpha1,
                           gamma2, beta2, alpha2, conv_w, conv_b, eps)
    assert out.shape == (B, C, H, W)
    assert jnp.allclose(out, ref, rtol=2e-3, atol=2e-3), "mismatch vs reference"

    print("KERNEL_OK")
</pallas_src>

<mosaic_0001>
module attributes {stable_mosaic.version = 11 : i64} {
  func.func @_cond_instance_norm_kernel(%arg0: i32, %arg1: memref<2x4x256xf32, #tpu.memory_space<vmem>>, %arg2: memref<2x4x1xf32, #tpu.memory_space<vmem>>, %arg3: memref<2x4x1xf32, #tpu.memory_space<vmem>>, %arg4: memref<2x4x1xf32, #tpu.memory_space<vmem>>, %arg5: memref<2x4x256xf32, #tpu.memory_space<vmem>>) attributes {dimension_semantics = [#tpu.dimension_semantics<parallel>], iteration_bounds = array<i64: 1>, scalar_prefetch = 0 : i64, scratch_operands = 0 : i64, tpu.core_type = #tpu.core_type<tc>, window_params = [{transform_indices = @transform_0, window_bounds = array<i64: 2, 4, 256>}, {transform_indices = @transform_1, window_bounds = array<i64: 2, 4, 1>}, {transform_indices = @transform_2, window_bounds = array<i64: 2, 4, 1>}, {transform_indices = @transform_3, window_bounds = array<i64: 2, 4, 1>}, {transform_indices = @transform_4, window_bounds = array<i64: 2, 4, 256>}]} {
    %c0 = arith.constant 0 : index
    %c0_0 = arith.constant 0 : index
    %c0_1 = arith.constant 0 : index
    %0 = vector.load %arg1[%c0, %c0_0, %c0_1] : memref<2x4x256xf32, #tpu.memory_space<vmem>>, vector<2x4x256xf32>
    %c0_2 = arith.constant 0 : index
    %c0_3 = arith.constant 0 : index
    %c0_4 = arith.constant 0 : index
    %1 = vector.load %arg2[%c0_2, %c0_3, %c0_4] : memref<2x4x1xf32, #tpu.memory_space<vmem>>, vector<2x4x1xf32>
    %c0_5 = arith.constant 0 : index
    %c0_6 = arith.constant 0 : index
    %c0_7 = arith.constant 0 : index
    %2 = vector.load %arg3[%c0_5, %c0_6, %c0_7] : memref<2x4x1xf32, #tpu.memory_space<vmem>>, vector<2x4x1xf32>
    %c0_8 = arith.constant 0 : index
    %c0_9 = arith.constant 0 : index
    %c0_10 = arith.constant 0 : index
    %3 = vector.load %arg4[%c0_8, %c0_9, %c0_10] : memref<2x4x1xf32, #tpu.memory_space<vmem>>, vector<2x4x1xf32>
    %cst = arith.constant dense<0.000000e+00> : vector<2x4xf32>
    %4 = vector.multi_reduction <add>, %0, %cst [2] : vector<2x4x256xf32> to vector<2x4xf32>
    %5 = vector.shape_cast %4 : vector<2x4xf32> to vector<2x4x1xf32>
    %6 = arith.mulf %0, %0 : vector<2x4x256xf32>
    %cst_11 = arith.constant dense<0.000000e+00> : vector<2x4xf32>
    %7 = vector.multi_reduction <add>, %6, %cst_11 [2] : vector<2x4x256xf32> to vector<2x4xf32>
    %8 = vector.shape_cast %7 : vector<2x4xf32> to vector<2x4x1xf32>
    %cst_12 = arith.constant 3.906250e-03 : f32
    %9 = vector.broadcast %cst_12 : f32 to vector<2x4x1xf32>
    %10 = arith.mulf %5, %9 : vector<2x4x1xf32>
    %cst_13 = arith.constant 2.560000e+02 : f32
    %11 = vector.broadcast %cst_13 : f32 to vector<2x4x1xf32>
    %12 = arith.mulf %11, %10 : vector<2x4x1xf32>
    %13 = arith.mulf %12, %10 : vector<2x4x1xf32>
    %14 = arith.subf %8, %13 : vector<2x4x1xf32>
    %cst_14 = arith.constant 0.000000e+00 : f32
    %15 = vector.broadcast %cst_14 : f32 to vector<2x4x1xf32>
    %16 = arith.maximumf %14, %15 : vector<2x4x1xf32>
    %cst_15 = arith.constant 0.00392156886 : f32
    %17 = vector.broadcast %cst_15 : f32 to vector<2x4x1xf32>
    %18 = arith.mulf %16, %17 : vector<2x4x1xf32>
    %cst_16 = arith.constant 9.99999974E-6 : f32
    %19 = vector.broadcast %cst_16 : f32 to vector<2x4x1xf32>
    %20 = arith.addf %18, %19 : vector<2x4x1xf32>
    %21 = math.rsqrt %20 : vector<2x4x1xf32>
    %cst_17 = arith.constant dense<0.000000e+00> : vector<2x1xf32>
    %22 = vector.multi_reduction <add>, %10, %cst_17 [1] : vector<2x4x1xf32> to vector<2x1xf32>
    %23 = vector.shape_cast %22 : vector<2x1xf32> to vector<2x1x1xf32>
    %cst_18 = arith.constant 4.000000e+00 : f32
    %24 = vector.broadcast %cst_18 : f32 to vector<2x1x1xf32>
    %25 = arith.divf %23, %24 : vector<2x1x1xf32>
    %26 = vector.broadcast %25 : vector<2x1x1xf32> to vector<2x4x1xf32>
    %27 = arith.subf %10, %26 : vector<2x4x1xf32>
    %28 = arith.mulf %27, %27 : vector<2x4x1xf32>
    %cst_19 = arith.constant dense<0.000000e+00> : vector<2x1xf32>
    %29 = vector.multi_reduction <add>, %28, %cst_19 [1] : vector<2x4x1xf32> to vector<2x1xf32>
    %30 = vector.shape_cast %29 : vector<2x1xf32> to vector<2x1x1xf32>
    %cst_20 = arith.constant 0.333333343 : f32
    %31 = vector.broadcast %cst_20 : f32 to vector<2x1x1xf32>
    %32 = arith.mulf %30, %31 : vector<2x1x1xf32>
    %cst_21 = arith.constant 9.99999974E-6 : f32
    %33 = vector.broadcast %cst_21 : f32 to vector<2x1x1xf32>
    %34 = arith.addf %32, %33 : vector<2x1x1xf32>
    %35 = math.rsqrt %34 : vector<2x1x1xf32>
    %36 = arith.mulf %1, %21 : vector<2x4x1xf32>
    %37 = arith.mulf %10, %36 : vector<2x4x1xf32>
    %38 = arith.subf %2, %37 : vector<2x4x1xf32>
    %39 = vector.broadcast %25 : vector<2x1x1xf32> to vector<2x4x1xf32>
    %40 = arith.subf %10, %39 : vector<2x4x1xf32>
    %41 = arith.mulf %3, %40 : vector<2x4x1xf32>
    %42 = vector.broadcast %35 : vector<2x1x1xf32> to vector<2x4x1xf32>
    %43 = arith.mulf %41, %42 : vector<2x4x1xf32>
    %44 = arith.addf %38, %43 : vector<2x4x1xf32>
    %45 = vector.broadcast %36 : vector<2x4x1xf32> to vector<2x4x256xf32>
    %46 = arith.mulf %0, %45 : vector<2x4x256xf32>
    %47 = vector.broadcast %44 : vector<2x4x1xf32> to vector<2x4x256xf32>
    %48 = arith.addf %46, %47 : vector<2x4x256xf32>
    %c0_22 = arith.constant 0 : index
    %c0_23 = arith.constant 0 : index
    %c0_24 = arith.constant 0 : index
    %49 = vector.load %arg5[%c0_22, %c0_23, %c0_24] : memref<2x4x256xf32, #tpu.memory_space<vmem>>, vector<2x4x256xf32>
    tpu.vector_store %arg5[%c0_22, %c0_23, %c0_24], %48 {strides = array<i32>} : memref<2x4x256xf32, #tpu.memory_space<vmem>>, vector<2x4x256xf32>,
    return
  }
  func.func @transform_0(%arg0: i32) -> (i32, i32, i32) {
    %c0_i32 = arith.constant 0 : i32
    %c0_i32_0 = arith.constant 0 : i32
    %c0_i32_1 = arith.constant 0 : i32
    return %arg0, %c0_i32, %c0_i32_0 : i32, i32, i32
  }
  func.func @transform_1(%arg0: i32) -> (i32, i32, i32) {
    %c0_i32 = arith.constant 0 : i32
    %c0_i32_0 = arith.constant 0 : i32
    %c0_i32_1 = arith.constant 0 : i32
    return %arg0, %c0_i32, %c0_i32_0 : i32, i32, i32
  }
  func.func @transform_2(%arg0: i32) -> (i32, i32, i32) {
    %c0_i32 = arith.constant 0 : i32
    %c0_i32_0 = arith.constant 0 : i32
    %c0_i32_1 = arith.constant 0 : i32
    return %arg0, %c0_i32, %c0_i32_0 : i32, i32, i32
  }
  func.func @transform_3(%arg0: i32) -> (i32, i32, i32) {
    %c0_i32 = arith.constant 0 : i32
    %c0_i32_0 = arith.constant 0 : i32
    %c0_i32_1 = arith.constant 0 : i32
    return %arg0, %c0_i32, %c0_i32_0 : i32, i32, i32
  }
  func.func @transform_4(%arg0: i32) -> (i32, i32, i32) {
    %c0_i32 = arith.constant 0 : i32
    %c0_i32_0 = arith.constant 0 : i32
    %c0_i32_1 = arith.constant 0 : i32
    return %arg0, %c0_i32, %c0_i32_0 : i32, i32, i32
  }
}

module attributes {stable_mosaic.version = 11 : i64} {
  func.func @_avg_pool5_kernel(%arg0: i32, %arg1: memref<1x4x20x20xf32, #tpu.memory_space<vmem>>, %arg2: memref<1x4x16x16xf32, #tpu.memory_space<vmem>>, %arg3: memref<4x16x20xf32, #tpu.memory_space<vmem>>) attributes {dimension_semantics = [#tpu.dimension_semantics<parallel>], iteration_bounds = array<i64: 2>, scalar_prefetch = 0 : i64, scratch_operands = 1 : i64, tpu.core_type = #tpu.core_type<tc>, window_params = [{transform_indices = @transform_0, window_bounds = array<i64: 1, 4, 20, 20>}, {transform_indices = @transform_1, window_bounds = array<i64: 1, 4, 16, 16>}]} {
    %c0 = arith.constant 0 : index
    %c0_0 = arith.constant 0 : index
    %c0_1 = arith.constant 0 : index
    %c0_2 = arith.constant 0 : index
    %0 = vector.load %arg1[%c0, %c0_0, %c0_1, %c0_2] : memref<1x4x20x20xf32, #tpu.memory_space<vmem>>, vector<1x4x16x20xf32>
    %1 = vector.shape_cast %0 : vector<1x4x16x20xf32> to vector<4x16x20xf32>
    %c0_3 = arith.constant 0 : index
    %c0_4 = arith.constant 0 : index
    %c1 = arith.constant 1 : index
    %c0_5 = arith.constant 0 : index
    %2 = vector.load %arg1[%c0_3, %c0_4, %c1, %c0_5] : memref<1x4x20x20xf32, #tpu.memory_space<vmem>>, vector<1x4x16x20xf32>
    %3 = vector.shape_cast %2 : vector<1x4x16x20xf32> to vector<4x16x20xf32>
    %4 = arith.addf %1, %3 : vector<4x16x20xf32>
    %c0_6 = arith.constant 0 : index
    %c0_7 = arith.constant 0 : index
    %c2 = arith.constant 2 : index
    %c0_8 = arith.constant 0 : index
    %5 = vector.load %arg1[%c0_6, %c0_7, %c2, %c0_8] : memref<1x4x20x20xf32, #tpu.memory_space<vmem>>, vector<1x4x16x20xf32>
    %6 = vector.shape_cast %5 : vector<1x4x16x20xf32> to vector<4x16x20xf32>
    %7 = arith.addf %4, %6 : vector<4x16x20xf32>
    %c0_9 = arith.constant 0 : index
    %c0_10 = arith.constant 0 : index
    %c3 = arith.constant 3 : index
    %c0_11 = arith.constant 0 : index
    %8 = vector.load %arg1[%c0_9, %c0_10, %c3, %c0_11] : memref<1x4x20x20xf32, #tpu.memory_space<vmem>>, vector<1x4x16x20xf32>
    %9 = vector.shape_cast %8 : vector<1x4x16x20xf32> to vector<4x16x20xf32>
    %10 = arith.addf %7, %9 : vector<4x16x20xf32>
    %c0_12 = arith.constant 0 : index
    %c0_13 = arith.constant 0 : index
    %c4 = arith.constant 4 : index
    %c0_14 = arith.constant 0 : index
    %11 = vector.load %arg1[%c0_12, %c0_13, %c4, %c0_14] : memref<1x4x20x20xf32, #tpu.memory_space<vmem>>, vector<1x4x16x20xf32>
    %12 = vector.shape_cast %11 : vector<1x4x16x20xf32> to vector<4x16x20xf32>
    %13 = arith.addf %10, %12 : vector<4x16x20xf32>
    %c0_15 = arith.constant 0 : index
    %c0_16 = arith.constant 0 : index
    %c0_17 = arith.constant 0 : index
    %14 = vector.load %arg3[%c0_15, %c0_16, %c0_17] : memref<4x16x20xf32, #tpu.memory_space<vmem>>, vector<4x16x20xf32>
    tpu.vector_store %arg3[%c0_15, %c0_16, %c0_17], %13 {strides = array<i32>} : memref<4x16x20xf32, #tpu.memory_space<vmem>>, vector<4x16x20xf32>,
    %c0_18 = arith.constant 0 : index
    %c0_19 = arith.constant 0 : index
    %c0_20 = arith.constant 0 : index
    %15 = vector.load %arg3[%c0_18, %c0_19, %c0_20] : memref<4x16x20xf32, #tpu.memory_space<vmem>>, vector<4x16x16xf32>
    %c0_21 = arith.constant 0 : index
    %c0_22 = arith.constant 0 : index
    %c1_23 = arith.constant 1 : index
    %16 = vector.load %arg3[%c0_21, %c0_22, %c1_23] : memref<4x16x20xf32, #tpu.memory_space<vmem>>, vector<4x16x16xf32>
    %17 = arith.addf %15, %16 : vector<4x16x16xf32>
    %c0_24 = arith.constant 0 : index
    %c0_25 = arith.constant 0 : index
    %c2_26 = arith.constant 2 : index
    %18 = vector.load %arg3[%c0_24, %c0_25, %c2_26] : memref<4x16x20xf32, #tpu.memory_space<vmem>>, vector<4x16x16xf32>
    %19 = arith.addf %17, %18 : vector<4x16x16xf32>
    %c0_27 = arith.constant 0 : index
    %c0_28 = arith.constant 0 : index
    %c3_29 = arith.constant 3 : index
    %20 = vector.load %arg3[%c0_27, %c0_28, %c3_29] : memref<4x16x20xf32, #tpu.memory_space<vmem>>, vector<4x16x16xf32>
    %21 = arith.addf %19, %20 : vector<4x16x16xf32>
    %c0_30 = arith.constant 0 : index
    %c0_31 = arith.constant 0 : index
    %c4_32 = arith.constant 4 : index
    %22 = vector.load %arg3[%c0_30, %c0_31, %c4_32] : memref<4x16x20xf32, #tpu.memory_space<vmem>>, vector<4x16x16xf32>
    %23 = arith.addf %21, %22 : vector<4x16x16xf32>
    %cst = arith.constant 4.000000e-02 : f32
    %24 = vector.broadcast %cst : f32 to vector<4x16x16xf32>
    %25 = arith.mulf %23, %24 : vector<4x16x16xf32>
    %c0_33 = arith.constant 0 : index
    %c0_34 = arith.constant 0 : index
    %c0_35 = arith.constant 0 : index
    %c0_36 = arith.constant 0 : index
    %26 = vector.load %arg2[%c0_33, %c0_34, %c0_35, %c0_36] : memref<1x4x16x16xf32, #tpu.memory_space<vmem>>, vector<1x4x16x16xf32>
    %27 = vector.shape_cast %26 : vector<1x4x16x16xf32> to vector<4x16x16xf32>
    %28 = vector.shape_cast %25 : vector<4x16x16xf32> to vector<1x4x16x16xf32>
    tpu.vector_store %arg2[%c0_33, %c0_34, %c0_35, %c0_36], %28 {strides = array<i32>} : memref<1x4x16x16xf32, #tpu.memory_space<vmem>>, vector<1x4x16x16xf32>,
    return
  }
  func.func @transform_0(%arg0: i32) -> (i32, i32, i32, i32) {
    %c0_i32 = arith.constant 0 : i32
    %c0_i32_0 = arith.constant 0 : i32
    %c0_i32_1 = arith.constant 0 : i32
    %c0_i32_2 = arith.constant 0 : i32
    return %arg0, %c0_i32, %c0_i32_0, %c0_i32_1 : i32, i32, i32, i32
  }
  func.func @transform_1(%arg0: i32) -> (i32, i32, i32, i32) {
    %c0_i32 = arith.constant 0 : i32
    %c0_i32_0 = arith.constant 0 : i32
    %c0_i32_1 = arith.constant 0 : i32
    %c0_i32_2 = arith.constant 0 : i32
    return %arg0, %c0_i32, %c0_i32_0, %c0_i32_1 : i32, i32, i32, i32
  }
}

module attributes {stable_mosaic.version = 11 : i64} {
  func.func @_conv3x3_kernel(%arg0: i32, %arg1: memref<1x9x4x256xf32, #tpu.memory_space<vmem>>, %arg2: memref<9x4x4xf32, #tpu.memory_space<vmem>>, %arg3: memref<4x1xf32, #tpu.memory_space<vmem>>, %arg4: memref<1x4x256xf32, #tpu.memory_space<vmem>>) attributes {dimension_semantics = [#tpu.dimension_semantics<parallel>], iteration_bounds = array<i64: 2>, scalar_prefetch = 0 : i64, scratch_operands = 0 : i64, tpu.core_type = #tpu.core_type<tc>, window_params = [{transform_indices = @transform_0, window_bounds = array<i64: 1, 9, 4, 256>}, {pipeline_mode = #tpu.pipeline_mode<synchronous>, transform_indices = @transform_1, window_bounds = array<i64: 9, 4, 4>}, {pipeline_mode = #tpu.pipeline_mode<synchronous>, transform_indices = @transform_2, window_bounds = array<i64: 4, 1>}, {transform_indices = @transform_3, window_bounds = array<i64: 1, 4, 256>}]} {
    %cst = arith.constant 0.000000e+00 : f32
    %0 = vector.broadcast %cst : f32 to vector<4x256xf32>
    %c0 = arith.constant 0 : index
    %c0_0 = arith.constant 0 : index
    %c0_1 = arith.constant 0 : index
    %1 = vector.load %arg2[%c0, %c0_0, %c0_1] : memref<9x4x4xf32, #tpu.memory_space<vmem>>, vector<1x4x4xf32>
    %2 = vector.shape_cast %1 : vector<1x4x4xf32> to vector<4x4xf32>
    %c0_2 = arith.constant 0 : index
    %c0_3 = arith.constant 0 : index
    %c0_4 = arith.constant 0 : index
    %c0_5 = arith.constant 0 : index
    %3 = vector.load %arg1[%c0_2, %c0_3, %c0_4, %c0_5] : memref<1x9x4x256xf32, #tpu.memory_space<vmem>>, vector<1x1x4x256xf32>
    %4 = vector.shape_cast %3 : vector<1x1x4x256xf32> to vector<4x256xf32>
    %cst_6 = arith.constant dense<0.000000e+00> : vector<4x256xf32>
    %5 = tpu.matmul %2, %4, %cst_6 {dimension_numbers = #tpu.dot_dimension_numbers<[1], [0], [0], [1], [0, 0, 1, 1], [], []>} : vector<4x4xf32>, vector<4x256xf32>, vector<4x256xf32> -> vector<4x256xf32>
    %6 = arith.addf %0, %5 : vector<4x256xf32>
    %c1 = arith.constant 1 : index
    %c0_7 = arith.constant 0 : index
    %c0_8 = arith.constant 0 : index
    %7 = vector.load %arg2[%c1, %c0_7, %c0_8] : memref<9x4x4xf32, #tpu.memory_space<vmem>>, vector<1x4x4xf32>
    %8 = vector.shape_cast %7 : vector<1x4x4xf32> to vector<4x4xf32>
    %c0_9 = arith.constant 0 : index
    %c1_10 = arith.constant 1 : index
    %c0_11 = arith.constant 0 : index
    %c0_12 = arith.constant 0 : index
    %9 = vector.load %arg1[%c0_9, %c1_10, %c0_11, %c0_12] : memref<1x9x4x256xf32, #tpu.memory_space<vmem>>, vector<1x1x4x256xf32>
    %10 = vector.shape_cast %9 : vector<1x1x4x256xf32> to vector<4x256xf32>
    %cst_13 = arith.constant dense<0.000000e+00> : vector<4x256xf32>
    %11 = tpu.matmul %8, %10, %cst_13 {dimension_numbers = #tpu.dot_dimension_numbers<[1], [0], [0], [1], [0, 0, 1, 1], [], []>} : vector<4x4xf32>, vector<4x256xf32>, vector<4x256xf32> -> vector<4x256xf32>
    %12 = arith.addf %6, %11 : vector<4x256xf32>
    %c2 = arith.constant 2 : index
    %c0_14 = arith.constant 0 : index
    %c0_15 = arith.constant 0 : index
    %13 = vector.load %arg2[%c2, %c0_14, %c0_15] : memref<9x4x4xf32, #tpu.memory_space<vmem>>, vector<1x4x4xf32>
    %14 = vector.shape_cast %13 : vector<1x4x4xf32> to vector<4x4xf32>
    %c0_16 = arith.constant 0 : index
    %c2_17 = arith.constant 2 : index
    %c0_18 = arith.constant 0 : index
    %c0_19 = arith.constant 0 : index
    %15 = vector.load %arg1[%c0_16, %c2_17, %c0_18, %c0_19] : memref<1x9x4x256xf32, #tpu.memory_space<vmem>>, vector<1x1x4x256xf32>
    %16 = vector.shape_cast %15 : vector<1x1x4x256xf32> to vector<4x256xf32>
    %cst_20 = arith.constant dense<0.000000e+00> : vector<4x256xf32>
    %17 = tpu.matmul %14, %16, %cst_20 {dimension_numbers = #tpu.dot_dimension_numbers<[1], [0], [0], [1], [0, 0, 1, 1], [], []>} : vector<4x4xf32>, vector<4x256xf32>, vector<4x256xf32> -> vector<4x256xf32>
    %18 = arith.addf %12, %17 : vector<4x256xf32>
    %c3 = arith.constant 3 : index
    %c0_21 = arith.constant 0 : index
    %c0_22 = arith.constant 0 : index
    %19 = vector.load %arg2[%c3, %c0_21, %c0_22] : memref<9x4x4xf32, #tpu.memory_space<vmem>>, vector<1x4x4xf32>
    %20 = vector.shape_cast %19 : vector<1x4x4xf32> to vector<4x4xf32>
    %c0_23 = arith.constant 0 : index
    %c3_24 = arith.constant 3 : index
    %c0_25 = arith.constant 0 : index
    %c0_26 = arith.constant 0 : index
    %21 = vector.load %arg1[%c0_23, %c3_24, %c0_25, %c0_26] : memref<1x9x4x256xf32, #tpu.memory_space<vmem>>, vector<1x1x4x256xf32>
    %22 = vector.shape_cast %21 : vector<1x1x4x256xf32> to vector<4x256xf32>
    %cst_27 = arith.constant dense<0.000000e+00> : vector<4x256xf32>
    %23 = tpu.matmul %20, %22, %cst_27 {dimension_numbers = #tpu.dot_dimension_numbers<[1], [0], [0], [1], [0, 0, 1, 1], [], []>} : vector<4x4xf32>, vector<4x256xf32>, vector<4x256xf32> -> vector<4x256xf32>
    %24 = arith.addf %18, %23 : vector<4x256xf32>
    %c4 = arith.constant 4 : index
    %c0_28 = arith.constant 0 : index
    %c0_29 = arith.constant 0 : index
    %25 = vector.load %arg2[%c4, %c0_28, %c0_29] : memref<9x4x4xf32, #tpu.memory_space<vmem>>, vector<1x4x4xf32>
    %26 = vector.shape_cast %25 : vector<1x4x4xf32> to vector<4x4xf32>
    %c0_30 = arith.constant 0 : index
    %c4_31 = arith.constant 4 : index
    %c0_32 = arith.constant 0 : index
    %c0_33 = arith.constant 0 : index
    %27 = vector.load %arg1[%c0_30, %c4_31, %c0_32, %c0_33] : memref<1x9x4x256xf32, #tpu.memory_space<vmem>>, vector<1x1x4x256xf32>
    %28 = vector.shape_cast %27 : vector<1x1x4x256xf32> to vector<4x256xf32>
    %cst_34 = arith.constant dense<0.000000e+00> : vector<4x256xf32>
    %29 = tpu.matmul %26, %28, %cst_34 {dimension_numbers = #tpu.dot_dimension_numbers<[1], [0], [0], [1], [0, 0, 1, 1], [], []>} : vector<4x4xf32>, vector<4x256xf32>, vector<4x256xf32> -> vector<4x256xf32>
    %30 = arith.addf %24, %29 : vector<4x256xf32>
    %c5 = arith.constant 5 : index
    %c0_35 = arith.constant 0 : index
    %c0_36 = arith.constant 0 : index
    %31 = vector.load %arg2[%c5, %c0_35, %c0_36] : memref<9x4x4xf32, #tpu.memory_space<vmem>>, vector<1x4x4xf32>
    %32 = vector.shape_cast %31 : vector<1x4x4xf32> to vector<4x4xf32>
    %c0_37 = arith.constant 0 : index
    %c5_38 = arith.constant 5 : index
    %c0_39 = arith.constant 0 : index
    %c0_40 = arith.constant 0 : index
    %33 = vector.load %arg1[%c0_37, %c5_38, %c0_39, %c0_40] : memref<1x9x4x256xf32, #tpu.memory_space<vmem>>, vector<1x1x4x256xf32>
    %34 = vector.shape_cast %33 : vector<1x1x4x256xf32> to vector<4x256xf32>
    %cst_41 = arith.constant dense<0.000000e+00> : vector<4x256xf32>
    %35 = tpu.matmul %32, %34, %cst_41 {dimension_numbers = #tpu.dot_dimension_numbers<[1], [0], [0], [1], [0, 0, 1, 1], [], []>} : vector<4x4xf32>, vector<4x256xf32>, vector<4x256xf32> -> vector<4x256xf32>
    %36 = arith.addf %30, %35 : vector<4x256xf32>
    %c6 = arith.constant 6 : index
    %c0_42 = arith.constant 0 : index
    %c0_43 = arith.constant 0 : index
    %37 = vector.load %arg2[%c6, %c0_42, %c0_43] : memref<9x4x4xf32, #tpu.memory_space<vmem>>, vector<1x4x4xf32>
    %38 = vector.shape_cast %37 : vector<1x4x4xf32> to vector<4x4xf32>
    %c0_44 = arith.constant 0 : index
    %c6_45 = arith.constant 6 : index
    %c0_46 = arith.constant 0 : index
    %c0_47 = arith.constant 0 : index
    %39 = vector.load %arg1[%c0_44, %c6_45, %c0_46, %c0_47] : memref<1x9x4x256xf32, #tpu.memory_space<vmem>>, vector<1x1x4x256xf32>
    %40 = vector.shape_cast %39 : vector<1x1x4x256xf32> to vector<4x256xf32>
    %cst_48 = arith.constant dense<0.000000e+00> : vector<4x256xf32>
    %41 = tpu.matmul %38, %40, %cst_48 {dimension_numbers = #tpu.dot_dimension_numbers<[1], [0], [0], [1], [0, 0, 1, 1], [], []>} : vector<4x4xf32>, vector<4x256xf32>, vector<4x256xf32> -> vector<4x256xf32>
    %42 = arith.addf %36, %41 : vector<4x256xf32>
    %c7 = arith.constant 7 : index
    %c0_49 = arith.constant 0 : index
    %c0_50 = arith.constant 0 : index
    %43 = vector.load %arg2[%c7, %c0_49, %c0_50] : memref<9x4x4xf32, #tpu.memory_space<vmem>>, vector<1x4x4xf32>
    %44 = vector.shape_cast %43 : vector<1x4x4xf32> to vector<4x4xf32>
    %c0_51 = arith.constant 0 : index
    %c7_52 = arith.constant 7 : index
    %c0_53 = arith.constant 0 : index
    %c0_54 = arith.constant 0 : index
    %45 = vector.load %arg1[%c0_51, %c7_52, %c0_53, %c0_54] : memref<1x9x4x256xf32, #tpu.memory_space<vmem>>, vector<1x1x4x256xf32>
    %46 = vector.shape_cast %45 : vector<1x1x4x256xf32> to vector<4x256xf32>
    %cst_55 = arith.constant dense<0.000000e+00> : vector<4x256xf32>
    %47 = tpu.matmul %44, %46, %cst_55 {dimension_numbers = #tpu.dot_dimension_numbers<[1], [0], [0], [1], [0, 0, 1, 1], [], []>} : vector<4x4xf32>, vector<4x256xf32>, vector<4x256xf32> -> vector<4x256xf32>
    %48 = arith.addf %42, %47 : vector<4x256xf32>
    %c8 = arith.constant 8 : index
    %c0_56 = arith.constant 0 : index
    %c0_57 = arith.constant 0 : index
    %49 = vector.load %arg2[%c8, %c0_56, %c0_57] : memref<9x4x4xf32, #tpu.memory_space<vmem>>, vector<1x4x4xf32>
    %50 = vector.shape_cast %49 : vector<1x4x4xf32> to vector<4x4xf32>
    %c0_58 = arith.constant 0 : index
    %c8_59 = arith.constant 8 : index
    %c0_60 = arith.constant 0 : index
    %c0_61 = arith.constant 0 : index
    %51 = vector.load %arg1[%c0_58, %c8_59, %c0_60, %c0_61] : memref<1x9x4x256xf32, #tpu.memory_space<vmem>>, vector<1x1x4x256xf32>
    %52 = vector.shape_cast %51 : vector<1x1x4x256xf32> to vector<4x256xf32>
    %cst_62 = arith.constant dense<0.000000e+00> : vector<4x256xf32>
    %53 = tpu.matmul %50, %52, %cst_62 {dimension_numbers = #tpu.dot_dimension_numbers<[1], [0], [0], [1], [0, 0, 1, 1], [], []>} : vector<4x4xf32>, vector<4x256xf32>, vector<4x256xf32> -> vector<4x256xf32>
    %54 = arith.addf %48, %53 : vector<4x256xf32>
    %c0_63 = arith.constant 0 : index
    %c0_64 = arith.constant 0 : index
    %55 = vector.load %arg3[%c0_63, %c0_64] : memref<4x1xf32, #tpu.memory_space<vmem>>, vector<4x1xf32>
    %56 = vector.broadcast %55 : vector<4x1xf32> to vector<4x256xf32>
    %57 = arith.addf %54, %56 : vector<4x256xf32>
    %c0_65 = arith.constant 0 : index
    %c0_66 = arith.constant 0 : index
    %c0_67 = arith.constant 0 : index
    %58 = vector.load %arg4[%c0_65, %c0_66, %c0_67] : memref<1x4x256xf32, #tpu.memory_space<vmem>>, vector<1x4x256xf32>
    %59 = vector.shape_cast %58 : vector<1x4x256xf32> to vector<4x256xf32>
    %60 = vector.shape_cast %57 : vector<4x256xf32> to vector<1x4x256xf32>
    tpu.vector_store %arg4[%c0_65, %c0_66, %c0_67], %60 {strides = array<i32>} : memref<1x4x256xf32, #tpu.memory_space<vmem>>, vector<1x4x256xf32>,
    return
  }
  func.func @transform_0(%arg0: i32) -> (i32, i32, i32, i32) {
    %c0_i32 = arith.constant 0 : i32
    %c0_i32_0 = arith.constant 0 : i32
    %c0_i32_1 = arith.constant 0 : i32
    %c0_i32_2 = arith.constant 0 : i32
    return %arg0, %c0_i32, %c0_i32_0, %c0_i32_1 : i32, i32, i32, i32
  }
  func.func @transform_1(%arg0: i32) -> (i32, i32, i32) {
    %c0_i32 = arith.constant 0 : i32
    %c0_i32_0 = arith.constant 0 : i32
    %c0_i32_1 = arith.constant 0 : i32
    %c0_i32_2 = arith.constant 0 : i32
    return %c0_i32, %c0_i32_0, %c0_i32_1 : i32, i32, i32
  }
  func.func @transform_2(%arg0: i32) -> (i32, i32) {
    %c0_i32 = arith.constant 0 : i32
    %c0_i32_0 = arith.constant 0 : i32
    %c0_i32_1 = arith.constant 0 : i32
    return %c0_i32, %c0_i32_0 : i32, i32
  }
  func.func @transform_3(%arg0: i32) -> (i32, i32, i32) {
    %c0_i32 = arith.constant 0 : i32
    %c0_i32_0 = arith.constant 0 : i32
    %c0_i32_1 = arith.constant 0 : i32
    return %arg0, %c0_i32, %c0_i32_0 : i32, i32, i32
  }
}

</mosaic_0001>

<llo_original>
// kernel: residual_pooling_block.4
$region0: #{residual_pooling_block.4}
  #allocation0 [shape = 'u32[]', space=smem, size = 0x4, offset = 0x4, fixed_abs, tag = 'smem constant byte address 0x4 - core index']
  #allocation1 [shape = 'u32[144,128]{1,0:T(1,128)}', space=vmem, size = 0x12000, scoped, tag = 'internal scratch']
  %s0 = inlined_call_operand.vmem [shape: f32[2,4,256], index: 0, kind: input, shape index: {}]
  %s1 = inlined_call_operand.vmem [shape: f32[2,4,1], index: 1, kind: input, shape index: {}]
  %s2 = inlined_call_operand.vmem [shape: f32[2,4,1], index: 2, kind: input, shape index: {}]
  %s3 = inlined_call_operand.vmem [shape: f32[2,4,1], index: 3, kind: input, shape index: {}]
  %s4 = inlined_call_operand.vmem [shape: f32[2,4,256], index: 4, kind: output, shape index: {}]
  %s5 = sld [smem:[#allocation0]]
  $region26: #{residual_pooling_block.4} parent=0
    _
  %s7 = ssub.s32 1, %s5
  %s8 = scalar_select 0, %s7, %s5
  // Predicated region
  $region2: #{residual_pooling_block.4} parent=0 // pred_check
    _
  $region3: #{residual_pooling_block.4} parent=0 // pred_check_branch
    %10 = sbr.rel (0) target = $region5
  $region4: #{residual_pooling_block.4} parent=0 // pred_region
    _
  $region5: #{residual_pooling_block.4} parent=0 // pred_fallthru
    _
  // Predicated region
  $region6: #{residual_pooling_block.4} parent=0 // pred_check
    _
  $region7: #{residual_pooling_block.4} parent=0 // pred_check_branch
    %12 = sbr.rel (0) target = $region9
  $region8: #{residual_pooling_block.4} parent=0 // pred_region
    _
  $region9: #{residual_pooling_block.4} parent=0 // pred_fallthru
    _
  // Predicated region
  $region10: #{residual_pooling_block.4} parent=0 // pred_check
    _
  $region11: #{residual_pooling_block.4} parent=0 // pred_check_branch
    %14 = sbr.rel (0) target = $region13
  $region12: #{residual_pooling_block.4} parent=0 // pred_region
    _
  $region13: #{residual_pooling_block.4} parent=0 // pred_fallthru
    _
  // Predicated region
  $region14: #{residual_pooling_block.4} parent=0 // pred_check
    _
  $region15: #{residual_pooling_block.4} parent=0 // pred_check_branch
    %16 = sbr.rel (0) target = $region17
  $region16: #{residual_pooling_block.4} parent=0 // pred_region
    _
  $region17: #{residual_pooling_block.4} parent=0 // pred_fallthru
    _
  %v17 = vld [vmem:[%s0] sm:$0xff]
  %v18 = vld [vmem:[%s0 + $0x8] sm:$0xff]
  %v19 = vld [vmem:[%s1] sm:$0xf]
  %v20 = vld [vmem:[%s1 + $0x4] sm:$0xf]
  %v21 = vld [vmem:[%s2] sm:$0xf]
  %v22 = vld [vmem:[%s2 + $0x4] sm:$0xf]
  %v23 = vld [vmem:[%s3] sm:$0xf]
  %v24 = vld [vmem:[%s3 + $0x4] sm:$0xf]
  %v27 = vcombine.high %v17, %v17
  %v28 = vcombine.high %v18, %v18
  %vm31 = vcmask 1043456
  %v32 = vsel %vm31, %v17, 0.0
  %v33 = vsel %vm31, %v27, 0.0
  %v34 = vadd.f32 %v32, %v33
  %35 = vadd.xlane.f32.xlu0 %v34
  %v36 = vpop.xlane.xlu0 %35
  %v37 = vsel %vm31, %v18, 0.0
  %v38 = vsel %vm31, %v28, 0.0
  %v39 = vadd.f32 %v37, %v38
  %40 = vadd.xlane.f32.xlu0 %v39
  %v41 = vpop.xlane.xlu0 %40
  %v42 = vmul.f32 %v17, %v17
  %v43 = vmul.f32 %v18, %v18
  %v46 = vcombine.high %v42, %v42
  %v47 = vcombine.high %v43, %v43
  %v50 = vsel %vm31, %v42, 0.0
  %v51 = vsel %vm31, %v46, 0.0
  %v52 = vadd.f32 %v50, %v51
  %53 = vadd.xlane.f32.xlu0 %v52
  %v54 = vpop.xlane.xlu0 %53
  %v55 = vsel %vm31, %v43, 0.0
  %v56 = vsel %vm31, %v47, 0.0
  %v57 = vadd.f32 %v55, %v56
  %58 = vadd.xlane.f32.xlu0 %v57
  %v59 = vpop.xlane.xlu0 %58
  %v60 = vmul.f32 %v36, 0.00390625
  %v61 = vmul.f32 %v41, 0.00390625
  %v62 = vmul.f32 %v60, 256.0
  %v63 = vmul.f32 %v61, 256.0
  %v64 = vmul.f32 %v62, %v60
  %v65 = vmul.f32 %v63, %v61
  %v66 = vsub.f32 %v54, %v64
  %v67 = vsub.f32 %v59, %v65
  %v68 = vmax.f32 %v66, 0.0
  %v69 = vmax.f32 %v67, 0.0
  %v70 = vmul.f32 %v68, 0.003921569
  %v71 = vmul.f32 %v69, 0.003921569
  %v72 = vadd.f32 %v70, 1e-05
  %v73 = vadd.f32 %v71, 1e-05
  %v74 = vrsqrt.pop %v72
  %v75 = vrsqrt.pop %v73
  %v76 = vsel %vm31, %v60, 0.0
  %v77 = vrot.slane %v76, 4
  %v78 = vadd.f32 %v76, %v77
  %v79 = vrot.slane %v78, 2
  %v80 = vadd.f32 %v78, %v79
  %v81 = vrot.slane %v80, 1
  %v82 = vadd.f32 %v80, %v81
  %v83 = vsel %vm31, %v61, 0.0
  %v84 = vrot.slane %v83, 4
  %v85 = vadd.f32 %v83, %v84
  %v86 = vrot.slane %v85, 2
  %v87 = vadd.f32 %v85, %v86
  %v88 = vrot.slane %v87, 1
  %v89 = vadd.f32 %v87, %v88
  %v90 = vrcp.pop 4.0
  %v91 = vmul.f32 %v82, %v90
  %v92 = vmul.f32 %v89, %v90
  %v93 = vsub.f32 %v60, %v91
  %v94 = vsub.f32 %v61, %v92
  %v95 = vmul.f32 %v93, %v93
  %v96 = vmul.f32 %v94, %v94
  %v97 = vsel %vm31, %v95, 0.0
  %v98 = vrot.slane %v97, 4
  %v99 = vadd.f32 %v97, %v98
  %v100 = vrot.slane %v99, 2
  %v101 = vadd.f32 %v99, %v100
  %v102 = vrot.slane %v101, 1
  %v103 = vadd.f32 %v101, %v102
  %v104 = vsel %vm31, %v96, 0.0
  %v105 = vrot.slane %v104, 4
  %v106 = vadd.f32 %v104, %v105
  %v107 = vrot.slane %v106, 2
  %v108 = vadd.f32 %v106, %v107
  %v109 = vrot.slane %v108, 1
  %v110 = vadd.f32 %v108, %v109
  %v111 = vmul.f32 %v103, 0.33333334
  %v112 = vmul.f32 %v110, 0.33333334
  %v113 = vadd.f32 %v111, 1e-05
  %v114 = vadd.f32 %v112, 1e-05
  %v115 = vrsqrt.pop %v113
  %v116 = vrsqrt.pop %v114
  %v117 = vmul.f32 %v19, %v74
  %v118 = vmul.f32 %v20, %v75
  %v119 = vmul.f32 %v60, %v117
  %v120 = vmul.f32 %v61, %v118
  %v121 = vsub.f32 %v21, %v119
  %v122 = vsub.f32 %v22, %v120
  %v123 = vmul.f32 %v23, %v93
  %v124 = vmul.f32 %v24, %v94
  %v125 = vmul.f32 %v123, %v115
  %v126 = vmul.f32 %v124, %v116
  %v127 = vadd.f32 %v121, %v125
  %v128 = vadd.f32 %v122, %v126
  %130 = vset.pattern.permute.xlu0 0
  %131 = vperm.xlu0 %130, %v117
  %v132 = vpop.permute.xlu0 %131
  %134 = vset.pattern.permute.xlu0 0
  %135 = vperm.xlu0 %134, %v118
  %v136 = vpop.permute.xlu0 %135
  %v138 = vunpack.c.l.s4 839922192
  %v139 = vunpack.c.0.s8 %v138
  %v140 = vlaneseq
  %v141 = vshrl.u32 %v140, 7
  %v142 = vsub.s32 %v139, %v141
  %v143 = vrot.slane %v132, %v142
  %v145 = vunpack.c.l.s4 839922192
  %v146 = vunpack.c.0.s8 %v145
  %v147 = vlaneseq
  %v148 = vshrl.u32 %v147, 7
  %v149 = vsub.s32 %v146, %v148
  %v150 = vrot.slane %v136, %v149
  %v153 = vmul.f32 %v17, %v143
  %v154 = vmul.f32 %v18, %v150
  %156 = vset.pattern.permute.xlu0 0
  %157 = vperm.xlu0 %156, %v127
  %v158 = vpop.permute.xlu0 %157
  %160 = vset.pattern.permute.xlu0 0
  %161 = vperm.xlu0 %160, %v128
  %v162 = vpop.permute.xlu0 %161
  %v164 = vunpack.c.l.s4 839922192
  %v165 = vunpack.c.0.s8 %v164
  %v166 = vlaneseq
  %v167 = vshrl.u32 %v166, 7
  %v168 = vsub.s32 %v165, %v167
  %v169 = vrot.slane %v158, %v168
  %v171 = vunpack.c.l.s4 839922192
  %v172 = vunpack.c.0.s8 %v171
  %v173 = vlaneseq
  %v174 = vshrl.u32 %v173, 7
  %v175 = vsub.s32 %v172, %v174
  %v176 = vrot.slane %v162, %v175
  %v179 = vadd.f32 %v153, %v169
  %v180 = vadd.f32 %v154, %v176
  %181 = vst [vmem:[%s4] sm:$0xff] %v179
  %182 = vst [vmem:[%s4 + $0x8] sm:$0xff] %v180
  // Predicated region
  $region18: #{residual_pooling_block.4} parent=0 // pred_check
    _
  $region19: #{residual_pooling_block.4} parent=0 // pred_check_branch
    %184 = sbr.rel (0) target = $region21
  $region20: #{residual_pooling_block.4} parent=0 // pred_region
    _
  $region21: #{residual_pooling_block.4} parent=0 // pred_fallthru
    _
  // Predicated region
  $region22: #{residual_pooling_block.4} parent=0 // pred_check
    _
  $region23: #{residual_pooling_block.4} parent=0 // pred_check_branch
    %186 = sbr.rel (0) target = $region25
  $region24: #{residual_pooling_block.4} parent=0 // pred_region
    _
  $region25: #{residual_pooling_block.4} parent=0 // pred_fallthru
    _

// kernel: residual_pooling_block.5
$region0: #{residual_pooling_block.5}
  #allocation0 [shape = 'u32[]', space=smem, size = 0x4, offset = 0x4, fixed_abs, tag = 'smem constant byte address 0x4 - core index']
  #allocation1 [shape = 'u32[144,128]{1,0:T(1,128)}', space=vmem, size = 0x12000, scoped, tag = 'internal scratch']
  #allocation2 [shape = 'f32[4,16,20]{2,1,0:T(8,128)}', space=vmem, size = 0x8000, scoped, tag = 'scratch operand']
  %s0 = inlined_call_operand.vmem [shape: f32[2,4,20,20], index: 0, kind: input, shape index: {}]
  %s1 = inlined_call_operand.vmem [shape: f32[2,4,16,16], index: 1, kind: output, shape index: {}]
  %s2 = sld [smem:[#allocation0]]
  $region37: #{residual_pooling_block.5} parent=0
    _
  %s4 = ssub.s32 1, %s2
  %s5 = scalar_select 0, %s4, %s2
  loop: start=0, step=1, limit=4
  $region2: #{residual_pooling_block.5} parent=0 // loop_pre_header
    _
  $region3: #{residual_pooling_block.5} parent=0 // loop_header
    %s7 = sphi 0, %s11
    %p8 = scmp.ge.s32.totalorder %s7, 4
    %s17 = sphi 0, %s19
    %s20 = sphi 0, %s17
    %s21 = sphi 0, %s20
    %s37 = sphi 0, %s21
    %s43 = sphi 0, %s45
    %s46 = sphi 0, %s43
    %s47 = sphi 0, %s46
    %s63 = sphi 0, %s47
  $region4: #{residual_pooling_block.5} parent=0 // loop_header_branch
    %10 = sbr.rel (%p8) target = $region8
  $region5: #{residual_pooling_block.5} parent=0 // loop_body
    %s12 = ssub.s32 %s7, 1
    %s13 = ssub.s32 %s7, 2
    %s14 = sadd.s32 %s7, 1
    %s15 = ssub.s32 %s7, %s14
    %p16 = scmp.eq.s32.totalorder %s15, 0
    %s18 = sadd.s32 %s17, 1
    %s19 = scalar_select %p16, %s17, %s18
    %p22 = pneg %p16
    %p23 = scmp.eq.s32.totalorder %s7, 1
    %p24 = por %p22, %p23
    %p25 = scmp.ne.s32.totalorder %s17, %s20
    %p26 = scmp.eq.s32.totalorder %s7, 0
    %p27 = por %p25, %p26
    %p28 = scmp.ne.s32.totalorder %s17, %s20
    %p29 = scmp.eq.s32.totalorder %s12, 1
    %p30 = por %p28, %p29
    %p31 = scmp.ne.s32.totalorder %s20, %s21
    %p32 = scmp.eq.s32.totalorder %s12, 0
    %p33 = por %p31, %p32
    %p34 = scmp.ne.s32.totalorder %s20, %s21
    %p35 = scmp.eq.s32.totalorder %s13, 1
    %p36 = por %p34, %p35
    %p38 = scmp.ne.s32.totalorder %s21, %s37
    %p39 = scmp.eq.s32.totalorder %s13, 0
    %p40 = por %p38, %p39
    %s41 = ssub.s32 %s7, %s14
    %p42 = scmp.eq.s32.totalorder %s41, 0
    %s44 = sadd.s32 %s43, 1
    %s45 = scalar_select %p42, %s43, %s44
    %p48 = pneg %p42
    %p49 = scmp.eq.s32.totalorder %s7, 1
    %p50 = por %p48, %p49
    %p51 = scmp.ne.s32.totalorder %s43, %s46
    %p52 = scmp.eq.s32.totalorder %s7, 0
    %p53 = por %p51, %p52
    %p54 = scmp.ne.s32.totalorder %s43, %s46
    %p55 = scmp.eq.s32.totalorder %s12, 1
    %p56 = por %p54, %p55
    %p57 = scmp.ne.s32.totalorder %s46, %s47
    %p58 = scmp.eq.s32.totalorder %s12, 0
    %p59 = por %p57, %p58
    %p60 = scmp.ne.s32.totalorder %s46, %s47
    %p61 = scmp.eq.s32.totalorder %s13, 1
    %p62 = por %p60, %p61
    %p64 = scmp.ne.s32.totalorder %s47, %s63
    %p65 = scmp.eq.s32.totalorder %s13, 0
    %p66 = por %p64, %p65
    %p67 = scmp.le.s32.totalorder 1, %s7
    %p68 = scmp.lt.s32.totalorder %s7, 3
    %p69 = pnand %p67, %p68
    %p70 = pneg %p69
    // Predicated region
    $region9: #{residual_pooling_block.5} parent=5 // pred_check
      _
    $region10: #{residual_pooling_block.5} parent=5 // pred_check_branch
      %72 = sbr.rel (%p69) target = $region12
    $region11: #{residual_pooling_block.5} parent=5 // pred_region
      %s73 = ssub.s32 %s7, 1
    $region12: #{residual_pooling_block.5} parent=5 // pred_fallthru
      _
    %p74 = scmp.lt.s32.totalorder %s7, 2
    // Predicated region
    $region13: #{residual_pooling_block.5} parent=5 // pred_check
      %p75 = pneg %p74
    $region14: #{residual_pooling_block.5} parent=5 // pred_check_branch
      %77 = sbr.rel (%p75) target = $region16
    $region15: #{residual_pooling_block.5} parent=5 // pred_region
      // Predicated region
      $region17: #{residual_pooling_block.5} parent=15 // pred_check
        %p78 = pneg %p27
      $region18: #{residual_pooling_block.5} parent=15 // pred_check_branch
        %80 = sbr.rel (%p78) target = $region20
      $region19: #{residual_pooling_block.5} parent=15 // pred_region
        %p81 = scmp.lt.s32.totalorder %s7, 1
        %s82 = scalar_select %p81, %s7, 1
        %s83 = smul.addr %s82, 12
        %s84 = smul.addr %s83, 8
        %s85 = scalar_lea.vmem %s0, %s84
      $region20: #{residual_pooling_block.5} parent=15 // pred_fallthru
        _
    $region16: #{residual_pooling_block.5} parent=5 // pred_fallthru
      _
    %p86 = scmp.le.s32.totalorder 1, %s7
    %p87 = scmp.lt.s32.totalorder %s7, 3
    %p88 = pnand %p86, %p87
    %p89 = pneg %p88
    // Predicated region
    $region21: #{residual_pooling_block.5} parent=5 // pred_check
      _
    $region22: #{residual_pooling_block.5} parent=5 // pred_check_branch
      %91 = sbr.rel (%p88) target = $region24
    $region23: #{residual_pooling_block.5} parent=5 // pred_region
      %s92 = ssub.s32 %s7, 1
      %p93 = scmp.lt.s32.totalorder %s12, 1
      %s94 = scalar_select %p93, %s12, 1
      %s95 = smul.addr %s94, 12
      %s96 = smul.addr %s95, 8
      %s97 = scalar_lea.vmem %s0, %s96
      %p98 = pneg %p33
      %p99 = pneg %p30
      %p100 = pneg %p59
      %p101 = pneg %p56
      %p102 = scmp.lt.s32.totalorder %s12, 1
      %s103 = scalar_select %p102, %s12, 1
      %s104 = smul.addr %s103, 8
      %s105 = smul.addr %s104, 8
      %s106 = scalar_lea.vmem %s1, %s105
      %p107 = scmp.lt.s32.totalorder %s12, 1
      %s108 = scalar_select %p107, %s12, 1
      %s109 = smul.addr %s108, 12
      %s110 = smul.addr %s109, 8
      %s111 = scalar_lea.vmem %s0, %s110
      %p112 = scmp.lt.s32.totalorder %s12, 1
      %s113 = scalar_select %p112, %s12, 1
      %s114 = smul.addr %s113, 8
      %s115 = smul.addr %s114, 8
      %s116 = scalar_lea.vmem %s1, %s115
      %v117 = vld [vmem:[%s111] sm:$0xff]
      %v118 = vld [vmem:[%s111 + $0x8] sm:$0xff]
      %v119 = vld [vmem:[%s111 + $0x18] sm:$0xff]
      %v120 = vld [vmem:[%s111 + $0x20] sm:$0xff]
      %v121 = vld [vmem:[%s111 + $0x30] sm:$0xff]
      %v122 = vld [vmem:[%s111 + $0x38] sm:$0xff]
      %v123 = vld [vmem:[%s111 + $0x48] sm:$0xff]
      %v124 = vld [vmem:[%s111 + $0x50] sm:$0xff]
      %v125 = vld [vmem:[%s111 + $0x1] sm:$0xff]
      %v126 = vld [vmem:[%s111 + $0x9] sm:$0xff]
      %v127 = vld [vmem:[%s111 + $0x19] sm:$0xff]
      %v128 = vld [vmem:[%s111 + $0x21] sm:$0xff]
      %v129 = vld [vmem:[%s111 + $0x31] sm:$0xff]
      %v130 = vld [vmem:[%s111 + $0x39] sm:$0xff]
      %v131 = vld [vmem:[%s111 + $0x49] sm:$0xff]
      %v132 = vld [vmem:[%s111 + $0x51] sm:$0xff]
      %v133 = vadd.f32 %v117, %v125
      %v134 = vadd.f32 %v118, %v126
      %v135 = vadd.f32 %v119, %v127
      %v136 = vadd.f32 %v120, %v128
      %v137 = vadd.f32 %v121, %v129
      %v138 = vadd.f32 %v122, %v130
      %v139 = vadd.f32 %v123, %v131
      %v140 = vadd.f32 %v124, %v132
      %v141 = vld [vmem:[%s111 + $0x2] sm:$0xff]
      %v142 = vld [vmem:[%s111 + $0xa] sm:$0xff]
      %v143 = vld [vmem:[%s111 + $0x1a] sm:$0xff]
      %v144 = vld [vmem:[%s111 + $0x22] sm:$0xff]
      %v145 = vld [vmem:[%s111 + $0x32] sm:$0xff]
      %v146 = vld [vmem:[%s111 + $0x3a] sm:$0xff]
      %v147 = vld [vmem:[%s111 + $0x4a] sm:$0xff]
      %v148 = vld [vmem:[%s111 + $0x52] sm:$0xff]
      %v149 = vadd.f32 %v133, %v141
      %v150 = vadd.f32 %v134, %v142
      %v151 = vadd.f32 %v135, %v143
      %v152 = vadd.f32 %v136, %v144
      %v153 = vadd.f32 %v137, %v145
      %v154 = vadd.f32 %v138, %v146
      %v155 = vadd.f32 %v139, %v147
      %v156 = vadd.f32 %v140, %v148
      %v157 = vld [vmem:[%s111 + $0x3] sm:$0xff]
      %v158 = vld [vmem:[%s111 + $0xb] sm:$0xff]
      %v159 = vld [vmem:[%s111 + $0x1b] sm:$0xff]
      %v160 = vld [vmem:[%s111 + $0x23] sm:$0xff]
      %v161 = vld [vmem:[%s111 + $0x33] sm:$0xff]
      %v162 = vld [vmem:[%s111 + $0x3b] sm:$0xff]
      %v163 = vld [vmem:[%s111 + $0x4b] sm:$0xff]
      %v164 = vld [vmem:[%s111 + $0x53] sm:$0xff]
      %v165 = vadd.f32 %v149, %v157
      %v166 = vadd.f32 %v150, %v158
      %v167 = vadd.f32 %v151, %v159
      %v168 = vadd.f32 %v152, %v160
      %v169 = vadd.f32 %v153, %v161
      %v170 = vadd.f32 %v154, %v162
      %v171 = vadd.f32 %v155, %v163
      %v172 = vadd.f32 %v156, %v164
      %v173 = vld [vmem:[%s111 + $0x4] sm:$0xff]
      %v174 = vld [vmem:[%s111 + $0xc] sm:$0xff]
      %v175 = vld [vmem:[%s111 + $0x1c] sm:$0xff]
      %v176 = vld [vmem:[%s111 + $0x24] sm:$0xff]
      %v177 = vld [vmem:[%s111 + $0x34] sm:$0xff]
      %v178 = vld [vmem:[%s111 + $0x3c] sm:$0xff]
      %v179 = vld [vmem:[%s111 + $0x4c] sm:$0xff]
      %v180 = vld [vmem:[%s111 + $0x54] sm:$0xff]
      %v181 = vadd.f32 %v165, %v173
      %v182 = vadd.f32 %v166, %v174
      %v183 = vadd.f32 %v167, %v175
      %v184 = vadd.f32 %v168, %v176
      %v185 = vadd.f32 %v169, %v177
      %v186 = vadd.f32 %v170, %v178
      %v187 = vadd.f32 %v171, %v179
      %v188 = vadd.f32 %v172, %v180
      %vm189 = vcmask 162816
      %190 = vst.msk [vmem:[#allocation2] sm:$0xff] %vm189, %v181
      %191 = vst.msk [vmem:[#allocation2 + $0x8] sm:$0xff] %vm189, %v182
      %192 = vst.msk [vmem:[#allocation2 + $0x10] sm:$0xff] %vm189, %v183
      %193 = vst.msk [vmem:[#allocation2 + $0x18] sm:$0xff] %vm189, %v184
      %194 = vst.msk [vmem:[#allocation2 + $0x20] sm:$0xff] %vm189, %v185
      %195 = vst.msk [vmem:[#allocation2 + $0x28] sm:$0xff] %vm189, %v186
      %196 = vst.msk [vmem:[#allocation2 + $0x30] sm:$0xff] %vm189, %v187
      %197 = vst.msk [vmem:[#allocation2 + $0x38] sm:$0xff] %vm189, %v188
      %v198 = vld [vmem:[#allocation2] sm:$0xff]
      %v199 = vld [vmem:[#allocation2 + $0x8] sm:$0xff]
      %v200 = vld [vmem:[#allocation2 + $0x10] sm:$0xff]
      %v201 = vld [vmem:[#allocation2 + $0x18] sm:$0xff]
      %v202 = vld [vmem:[#allocation2 + $0x20] sm:$0xff]
      %v203 = vld [vmem:[#allocation2 + $0x28] sm:$0xff]
      %v204 = vld [vmem:[#allocation2 + $0x30] sm:$0xff]
      %v205 = vld [vmem:[#allocation2 + $0x38] sm:$0xff]
      %214 = vrot.lane.b32.xlu0 %v198, 127
      %v215 = vpop.permute.xlu0 %214
      %216 = vrot.lane.b32.xlu0 %v199, 127
      %v217 = vpop.permute.xlu0 %216
      %218 = vrot.lane.b32.xlu0 %v200, 127
      %v219 = vpop.permute.xlu0 %218
      %220 = vrot.lane.b32.xlu0 %v201, 127
      %v221 = vpop.permute.xlu0 %220
      %222 = vrot.lane.b32.xlu0 %v202, 127
      %v223 = vpop.permute.xlu0 %222
      %224 = vrot.lane.b32.xlu0 %v203, 127
      %v225 = vpop.permute.xlu0 %224
      %226 = vrot.lane.b32.xlu0 %v204, 127
      %v227 = vpop.permute.xlu0 %226
      %228 = vrot.lane.b32.xlu0 %v205, 127
      %v229 = vpop.permute.xlu0 %228
      %v238 = vadd.f32 %v198, %v215
      %v239 = vadd.f32 %v199, %v217
      %v240 = vadd.f32 %v200, %v219
      %v241 = vadd.f32 %v201, %v221
      %v242 = vadd.f32 %v202, %v223
      %v243 = vadd.f32 %v203, %v225
      %v244 = vadd.f32 %v204, %v227
      %v245 = vadd.f32 %v205, %v229
      %246 = vrot.lane.b32.xlu0 %v198, 126
      %v247 = vpop.permute.xlu0 %246
      %248 = vrot.lane.b32.xlu0 %v199, 126
      %v249 = vpop.permute.xlu0 %248
      %250 = vrot.lane.b32.xlu0 %v200, 126
      %v251 = vpop.permute.xlu0 %250
      %252 = vrot.lane.b32.xlu0 %v201, 126
      %v253 = vpop.permute.xlu0 %252
      %254 = vrot.lane.b32.xlu0 %v202, 126
      %v255 = vpop.permute.xlu0 %254
      %256 = vrot.lane.b32.xlu0 %v203, 126
      %v257 = vpop.permute.xlu0 %256
      %258 = vrot.lane.b32.xlu0 %v204, 126
      %v259 = vpop.permute.xlu0 %258
      %260 = vrot.lane.b32.xlu0 %v205, 126
      %v261 = vpop.permute.xlu0 %260
      %v270 = vadd.f32 %v238, %v247
      %v271 = vadd.f32 %v239, %v249
      %v272 = vadd.f32 %v240, %v251
      %v273 = vadd.f32 %v241, %v253
      %v274 = vadd.f32 %v242, %v255
      %v275 = vadd.f32 %v243, %v257
      %v276 = vadd.f32 %v244, %v259
      %v277 = vadd.f32 %v245, %v261
      %278 = vrot.lane.b32.xlu0 %v198, 125
      %v279 = vpop.permute.xlu0 %278
      %280 = vrot.lane.b32.xlu0 %v199, 125
      %v281 = vpop.permute.xlu0 %280
      %282 = vrot.lane.b32.xlu0 %v200, 125
      %v283 = vpop.permute.xlu0 %282
      %284 = vrot.lane.b32.xlu0 %v201, 125
      %v285 = vpop.permute.xlu0 %284
      %286 = vrot.lane.b32.xlu0 %v202, 125
      %v287 = vpop.permute.xlu0 %286
      %288 = vrot.lane.b32.xlu0 %v203, 125
      %v289 = vpop.permute.xlu0 %288
      %290 = vrot.lane.b32.xlu0 %v204, 125
      %v291 = vpop.permute.xlu0 %290
      %292 = vrot.lane.b32.xlu0 %v205, 125
      %v293 = vpop.permute.xlu0 %292
      %v302 = vadd.f32 %v270, %v279
      %v303 = vadd.f32 %v271, %v281
      %v304 = vadd.f32 %v272, %v283
      %v305 = vadd.f32 %v273, %v285
      %v306 = vadd.f32 %v274, %v287
      %v307 = vadd.f32 %v275, %v289
      %v308 = vadd.f32 %v276, %v291
      %v309 = vadd.f32 %v277, %v293
      %310 = vrot.lane.b32.xlu0 %v198, 124
      %v311 = vpop.permute.xlu0 %310
      %312 = vrot.lane.b32.xlu0 %v199, 124
      %v313 = vpop.permute.xlu0 %312
      %314 = vrot.lane.b32.xlu0 %v200, 124
      %v315 = vpop.permute.xlu0 %314
      %316 = vrot.lane.b32.xlu0 %v201, 124
      %v317 = vpop.permute.xlu0 %316
      %318 = vrot.lane.b32.xlu0 %v202, 124
      %v319 = vpop.permute.xlu0 %318
      %320 = vrot.lane.b32.xlu0 %v203, 124
      %v321 = vpop.permute.xlu0 %320
      %322 = vrot.lane.b32.xlu0 %v204, 124
      %v323 = vpop.permute.xlu0 %322
      %324 = vrot.lane.b32.xlu0 %v205, 124
      %v325 = vpop.permute.xlu0 %324
      %v334 = vadd.f32 %v302, %v311
      %v335 = vadd.f32 %v303, %v313
      %v336 = vadd.f32 %v304, %v315
      %v337 = vadd.f32 %v305, %v317
      %v338 = vadd.f32 %v306, %v319
      %v339 = vadd.f32 %v307, %v321
      %v340 = vadd.f32 %v308, %v323
      %v341 = vadd.f32 %v309, %v325
      %v342 = vmul.f32 %v334, 0.04
      %v343 = vmul.f32 %v335, 0.04
      %v344 = vmul.f32 %v336, 0.04
      %v345 = vmul.f32 %v337, 0.04
      %v346 = vmul.f32 %v338, 0.04
      %v347 = vmul.f32 %v339, 0.04
      %v348 = vmul.f32 %v340, 0.04
      %v349 = vmul.f32 %v341, 0.04
      %vm350 = vcmask 130048
      %351 = vst.msk [vmem:[%s116] sm:$0xff] %vm350, %v342
      %352 = vst.msk [vmem:[%s116 + $0x8] sm:$0xff] %vm350, %v343
      %353 = vst.msk [vmem:[%s116 + $0x10] sm:$0xff] %vm350, %v344
      %354 = vst.msk [vmem:[%s116 + $0x18] sm:$0xff] %vm350, %v345
      %355 = vst.msk [vmem:[%s116 + $0x20] sm:$0xff] %vm350, %v346
      %356 = vst.msk [vmem:[%s116 + $0x28] sm:$0xff] %vm350, %v347
      %357 = vst.msk [vmem:[%s116 + $0x30] sm:$0xff] %vm350, %v348
      %358 = vst.msk [vmem:[%s116 + $0x38] sm:$0xff] %vm350, %v349
      %p359 = scmp.lt.s32.totalorder %s12, 1
      %s360 = scalar_select %p359, %s12, 1
      %s361 = smul.addr %s360, 8
      %s362 = smul.addr %s361, 8
      %s363 = scalar_lea.vmem %s1, %s362
      // Predicated region
      $region25: #{residual_pooling_block.5} parent=23 // pred_check
        %p364 = pneg %p56
      $region26: #{residual_pooling_block.5} parent=23 // pred_check_branch
        %366 = sbr.rel (%p364) target = $region28
      $region27: #{residual_pooling_block.5} parent=23 // pred_region
        _
      $region28: #{residual_pooling_block.5} parent=23 // pred_fallthru
        _
    $region24: #{residual_pooling_block.5} parent=5 // pred_fallthru
      _
    %p367 = scmp.le.s32.totalorder 2, %s7
    // Predicated region
    $region29: #{residual_pooling_block.5} parent=5 // pred_check
      %p368 = pneg %p367
    $region30: #{residual_pooling_block.5} parent=5 // pred_check_branch
      %370 = sbr.rel (%p368) target = $region32
    $region31: #{residual_pooling_block.5} parent=5 // pred_region
      %s371 = ssub.s32 %s7, 2
      // Predicated region
      $region33: #{residual_pooling_block.5} parent=31 // pred_check
        %p372 = pneg %p62
      $region34: #{residual_pooling_block.5} parent=31 // pred_check_branch
        %374 = sbr.rel (%p372) target = $region36
      $region35: #{residual_pooling_block.5} parent=31 // pred_region
        %p375 = scmp.lt.s32.totalorder %s13, 1
        %s376 = scalar_select %p375, %s13, 1
        %s377 = smul.addr %s376, 8
        %s378 = smul.addr %s377, 8
        %s379 = scalar_lea.vmem %s1, %s378
      $region36: #{residual_pooling_block.5} parent=31 // pred_fallthru
        _
    $region32: #{residual_pooling_block.5} parent=5 // pred_fallthru
      _
  $region6: #{residual_pooling_block.5} parent=0 // loop_footer
    %s11 = sadd.s32 1, %s7
  $region7: #{residual_pooling_block.5} parent=0 // loop_footer_branch
    %6 = sbr.rel target = $region3
  $region8: #{residual_pooling_block.5} parent=0 // loop_exit
    _

// kernel: residual_pooling_block.7
$region0: #{residual_pooling_block.7}
  #allocation0 [shape = 'u32[]', space=smem, size = 0x4, offset = 0x4, fixed_abs, tag = 'smem constant byte address 0x4 - core index']
  #allocation1 [shape = 'u32[144,128]{1,0:T(1,128)}', space=vmem, size = 0x12000, scoped, tag = 'internal scratch']
  %s0 = inlined_call_operand.vmem [shape: f32[2,9,4,256], index: 0, kind: input, shape index: {}]
  %s1 = inlined_call_operand.vmem [shape: f32[9,4,4], index: 1, kind: input, shape index: {}]
  %s2 = inlined_call_operand.vmem [shape: f32[4,1], index: 2, kind: input, shape index: {}]
  %s3 = inlined_call_operand.vmem [shape: f32[2,4,256], index: 3, kind: output, shape index: {}]
  %s4 = sld [smem:[#allocation0]]
  $region45: #{residual_pooling_block.7} parent=0
    _
  %s6 = ssub.s32 1, %s4
  %s7 = scalar_select 0, %s6, %s4
  loop: start=0, step=1, limit=4
  $region2: #{residual_pooling_block.7} parent=0 // loop_pre_header
    _
  $region3: #{residual_pooling_block.7} parent=0 // loop_header
    %s9 = sphi 0, %s13
    %p10 = scmp.ge.s32.totalorder %s9, 4
    %s19 = sphi 0, %s21
    %s22 = sphi 0, %s19
    %s23 = sphi 0, %s22
    %s39 = sphi 0, %s23
    %s43 = sphi 0, %s43
    %s45 = sphi 0, %s43
    %s46 = sphi 0, %s45
    %s60 = sphi 0, %s46
    %s64 = sphi 0, %s64
    %s66 = sphi 0, %s64
    %s67 = sphi 0, %s66
    %s81 = sphi 0, %s67
    %s87 = sphi 0, %s89
    %s90 = sphi 0, %s87
    %s91 = sphi 0, %s90
    %s107 = sphi 0, %s91
  $region4: #{residual_pooling_block.7} parent=0 // loop_header_branch
    %12 = sbr.rel (%p10) target = $region8
  $region5: #{residual_pooling_block.7} parent=0 // loop_body
    %s14 = ssub.s32 %s9, 1
    %s15 = ssub.s32 %s9, 2
    %s16 = sadd.s32 %s9, 1
    %s17 = ssub.s32 %s9, %s16
    %p18 = scmp.eq.s32.totalorder %s17, 0
    %s20 = sadd.s32 %s19, 1
    %s21 = scalar_select %p18, %s19, %s20
    %p24 = pneg %p18
    %p25 = scmp.eq.s32.totalorder %s9, 1
    %p26 = por %p24, %p25
    %p27 = scmp.ne.s32.totalorder %s19, %s22
    %p28 = scmp.eq.s32.totalorder %s9, 0
    %p29 = por %p27, %p28
    %p30 = scmp.ne.s32.totalorder %s19, %s22
    %p31 = scmp.eq.s32.totalorder %s14, 1
    %p32 = por %p30, %p31
    %p33 = scmp.ne.s32.totalorder %s22, %s23
    %p34 = scmp.eq.s32.totalorder %s14, 0
    %p35 = por %p33, %p34
    %p36 = scmp.ne.s32.totalorder %s22, %s23
    %p37 = scmp.eq.s32.totalorder %s15, 1
    %p38 = por %p36, %p37
    %p40 = scmp.ne.s32.totalorder %s23, %s39
    %p41 = scmp.eq.s32.totalorder %s15, 0
    %p42 = por %p40, %p41
    %s44 = sadd.s32 %s43, 1
    %p47 = scmp.eq.s32.totalorder %s9, 1
    %p48 = scmp.ne.s32.totalorder %s43, %s45
    %p49 = scmp.eq.s32.totalorder %s9, 0
    %p50 = por %p48, %p49
    %p51 = scmp.ne.s32.totalorder %s43, %s45
    %p52 = scmp.eq.s32.totalorder %s14, 1
    %p53 = por %p51, %p52
    %p54 = scmp.ne.s32.totalorder %s45, %s46
    %p55 = scmp.eq.s32.totalorder %s14, 0
    %p56 = por %p54, %p55
    %p57 = scmp.ne.s32.totalorder %s45, %s46
    %p58 = scmp.eq.s32.totalorder %s15, 1
    %p59 = por %p57, %p58
    %p61 = scmp.ne.s32.totalorder %s46, %s60
    %p62 = scmp.eq.s32.totalorder %s15, 0
    %p63 = por %p61, %p62
    %s65 = sadd.s32 %s64, 1
    %p68 = scmp.eq.s32.totalorder %s9, 1
    %p69 = scmp.ne.s32.totalorder %s64, %s66
    %p70 = scmp.eq.s32.totalorder %s9, 0
    %p71 = por %p69, %p70
    %p72 = scmp.ne.s32.totalorder %s64, %s66
    %p73 = scmp.eq.s32.totalorder %s14, 1
    %p74 = por %p72, %p73
    %p75 = scmp.ne.s32.totalorder %s66, %s67
    %p76 = scmp.eq.s32.totalorder %s14, 0
    %p77 = por %p75, %p76
    %p78 = scmp.ne.s32.totalorder %s66, %s67
    %p79 = scmp.eq.s32.totalorder %s15, 1
    %p80 = por %p78, %p79
    %p82 = scmp.ne.s32.totalorder %s67, %s81
    %p83 = scmp.eq.s32.totalorder %s15, 0
    %p84 = por %p82, %p83
    %s85 = ssub.s32 %s9, %s16
    %p86 = scmp.eq.s32.totalorder %s85, 0
    %s88 = sadd.s32 %s87, 1
    %s89 = scalar_select %p86, %s87, %s88
    %p92 = pneg %p86
    %p93 = scmp.eq.s32.totalorder %s9, 1
    %p94 = por %p92, %p93
    %p95 = scmp.ne.s32.totalorder %s87, %s90
    %p96 = scmp.eq.s32.totalorder %s9, 0
    %p97 = por %p95, %p96
    %p98 = scmp.ne.s32.totalorder %s87, %s90
    %p99 = scmp.eq.s32.totalorder %s14, 1
    %p100 = por %p98, %p99
    %p101 = scmp.ne.s32.totalorder %s90, %s91
    %p102 = scmp.eq.s32.totalorder %s14, 0
    %p103 = por %p101, %p102
    %p104 = scmp.ne.s32.totalorder %s90, %s91
    %p105 = scmp.eq.s32.totalorder %s15, 1
    %p106 = por %p104, %p105
    %p108 = scmp.ne.s32.totalorder %s91, %s107
    %p109 = scmp.eq.s32.totalorder %s15, 0
    %p110 = por %p108, %p109
    %p111 = scmp.le.s32.totalorder 1, %s9
    %p112 = scmp.lt.s32.totalorder %s9, 3
    %p113 = pnand %p111, %p112
    %p114 = pneg %p113
    // Predicated region
    $region9: #{residual_pooling_block.7} parent=5 // pred_check
      _
    $region10: #{residual_pooling_block.7} parent=5 // pred_check_branch
      %116 = sbr.rel (%p113) target = $region12
    $region11: #{residual_pooling_block.7} parent=5 // pred_region
      %s117 = ssub.s32 %s9, 1
      // Predicated region
      $region13: #{residual_pooling_block.7} parent=11 // pred_check
        %p118 = pneg %p56
      $region14: #{residual_pooling_block.7} parent=11 // pred_check_branch
        %120 = sbr.rel (%p118) target = $region16
      $region15: #{residual_pooling_block.7} parent=11 // pred_region
        _
      $region16: #{residual_pooling_block.7} parent=11 // pred_fallthru
        _
      // Predicated region
      $region17: #{residual_pooling_block.7} parent=11 // pred_check
        %p121 = pneg %p77
      $region18: #{residual_pooling_block.7} parent=11 // pred_check_branch
        %123 = sbr.rel (%p121) target = $region20
      $region19: #{residual_pooling_block.7} parent=11 // pred_region
        _
      $region20: #{residual_pooling_block.7} parent=11 // pred_fallthru
        _
    $region12: #{residual_pooling_block.7} parent=5 // pred_fallthru
      _
    %p124 = scmp.lt.s32.totalorder %s9, 2
    // Predicated region
    $region21: #{residual_pooling_block.7} parent=5 // pred_check
      %p125 = pneg %p124
    $region22: #{residual_pooling_block.7} parent=5 // pred_check_branch
      %127 = sbr.rel (%p125) target = $region24
    $region23: #{residual_pooling_block.7} parent=5 // pred_region
      // Predicated region
      $region25: #{residual_pooling_block.7} parent=23 // pred_check
        %p128 = pneg %p29
      $region26: #{residual_pooling_block.7} parent=23 // pred_check_branch
        %130 = sbr.rel (%p128) target = $region28
      $region27: #{residual_pooling_block.7} parent=23 // pred_region
        %p131 = scmp.lt.s32.totalorder %s9, 1
        %s132 = scalar_select %p131, %s9, 1
        %s133 = smul.addr %s132, 18
        %s134 = smul.addr %s133, 4
        %s135 = scalar_lea.vmem %s0, %s134
      $region28: #{residual_pooling_block.7} parent=23 // pred_fallthru
        _
    $region24: #{residual_pooling_block.7} parent=5 // pred_fallthru
      _
    %p136 = scmp.le.s32.totalorder 1, %s9
    %p137 = scmp.lt.s32.totalorder %s9, 3
    %p138 = pnand %p136, %p137
    %p139 = pneg %p138
    // Predicated region
    $region29: #{residual_pooling_block.7} parent=5 // pred_check
      _
    $region30: #{residual_pooling_block.7} parent=5 // pred_check_branch
      %141 = sbr.rel (%p138) target = $region32
    $region31: #{residual_pooling_block.7} parent=5 // pred_region
      %s142 = ssub.s32 %s9, 1
      %p143 = scmp.lt.s32.totalorder %s14, 1
      %s144 = scalar_select %p143, %s14, 1
      %s145 = smul.addr %s144, 18
      %s146 = smul.addr %s145, 4
      %s147 = scalar_lea.vmem %s0, %s146
      %p148 = pneg %p35
      %p149 = pneg %p32
      %p150 = pneg %p56
      %p151 = pneg %p53
      %p152 = pneg %p77
      %p153 = pneg %p74
      %p154 = pneg %p103
      %p155 = pneg %p100
      %p156 = scmp.lt.s32.totalorder %s14, 1
      %s157 = scalar_select %p156, %s14, 1
      %s158 = smul.addr %s157, 2
      %s159 = smul.addr %s158, 4
      %s160 = scalar_lea.vmem %s3, %s159
      %p161 = scmp.lt.s32.totalorder %s14, 1
      %s162 = scalar_select %p161, %s14, 1
      %s163 = smul.addr %s162, 18
      %s164 = smul.addr %s163, 4
      %s165 = scalar_lea.vmem %s0, %s164
      %p166 = scmp.lt.s32.totalorder %s14, 1
      %s167 = scalar_select %p166, %s14, 1
      %s168 = smul.addr %s167, 2
      %s169 = smul.addr %s168, 4
      %s170 = scalar_lea.vmem %s3, %s169
      %v171 = vld [vmem:[%s1] sm:$0xf]
      %v172 = vld [vmem:[%s165] sm:$0xff]
      %s173 = scalar_lea.vmem %s1, 4
      %v174 = vld [vmem:[%s173] sm:$0xf]
      %s175 = scalar_lea.vmem %s165, 8
      %v176 = vld [vmem:[%s175] sm:$0xff]
      %v178 = vcombine.high %v176, %v176
      %vm179 = vcmask 31744
      %v181 = vsel %vm179, %v174, 0
      %vm183 = vcmask 1043456
      %v184 = vsel %vm183, %v176, 0
      %v186 = vsel %vm183, %v178, 0
      %188 = vmatprep.subr.mxu0 %v186
      %189 = vmatpush1.msra.mxu0 %v184
      %190 = vmatprep.subr.mxu0 0.0
      %191 = vmatpush1.msra.mxu0 0.0
      %192 = vmatprep.subr.mxu0 0.0
      %193 = vmatpush1.msra.mxu0 0.0
      %194 = vmatprep.subr.mxu0 0.0
      %195 = vmatpush1.msra.mxu0 0.0
      %196 = vmatprep.subr.mxu0 0.0
      %197 = vmatpush1.msra.mxu0 0.0
      %198 = vmatprep.subr.mxu0 0.0
      %199 = vmatpush1.msra.mxu0 0.0
      %200 = vmatprep.subr.mxu0 0.0
      %201 = vmatpush1.msra.mxu0 0.0
      %202 = vmatprep.subr.mxu0 0.0
      %203 = vmatpush1.msra.mxu0 0.0
      %204 = vmatprep.subr.mxu0 0.0
      %205 = vmatpush1.msra.mxu0 0.0
      %206 = vmatprep.subr.mxu0 0.0
      %207 = vmatpush1.msra.mxu0 0.0
      %208 = vmatprep.subr.mxu0 0.0
      %209 = vmatpush1.msra.mxu0 0.0
      %210 = vmatprep.subr.mxu0 0.0
      %211 = vmatpush1.msra.mxu0 0.0
      %212 = vmatprep.subr.mxu0 0.0
      %213 = vmatpush1.msra.mxu0 0.0
      %214 = vmatprep.subr.mxu0 0.0
      %215 = vmatpush1.msra.mxu0 0.0
      %216 = vmatprep.subr.mxu0 0.0
      %217 = vmatpush1.msra.mxu0 0.0
      %218 = vmatprep.subr.mxu0 0.0
      %219 = vmatpush1.msra.mxu0 0.0
      %220 = vmatprep.subr.mxu0 0.0
      %221 = vmatpush1.msra.mxu0 0.0
      %222 = vmatprep.subr.mxu0 0.0
      %223 = vmatpush1.msra.mxu0 0.0
      %224 = vmatprep.subr.mxu0 0.0
      %225 = vmatpush1.msra.mxu0 0.0
      %226 = vmatprep.subr.mxu0 0.0
      %227 = vmatpush1.msra.mxu0 0.0
      %228 = vmatprep.subr.mxu0 0.0
      %229 = vmatpush1.msra.mxu0 0.0
      %230 = vmatprep.subr.mxu0 0.0
      %231 = vmatpush1.msra.mxu0 0.0
      %232 = vmatprep.subr.mxu0 0.0
      %233 = vmatpush1.msra.mxu0 0.0
      %234 = vmatprep.subr.mxu0 0.0
      %235 = vmatpush1.msra.mxu0 0.0
      %236 = vmatprep.subr.mxu0 0.0
      %237 = vmatpush1.msra.mxu0 0.0
      %238 = vmatprep.subr.mxu0 0.0
      %239 = vmatpush1.msra.mxu0 0.0
      %240 = vmatprep.subr.mxu0 0.0
      %241 = vmatpush1.msra.mxu0 0.0
      %242 = vmatprep.subr.mxu0 0.0
      %243 = vmatpush1.msra.mxu0 0.0
      %244 = vmatprep.subr.mxu0 0.0
      %245 = vmatpush1.msra.mxu0 0.0
      %246 = vmatprep.subr.mxu0 0.0
      %247 = vmatpush1.msra.mxu0 0.0
      %248 = vmatprep.subr.mxu0 0.0
      %249 = vmatpush1.msra.mxu0 0.0
      %250 = vmatprep.subr.mxu0 0.0
      %251 = vmatpush1.msra.mxu0 0.0
      %252 = vmatprep.mubr.f32.mxu0 0.0
      %253 = vmatmul.mubr.f32.gmra.mrb[0].mxu0 %v181
      %v254 = vpop.f32.mrb[0].mxu0
      %v255 = vadd.f32 0.0, %v254
      %v256 = vpop.f32.mrb[0].mxu0
      %v257 = vadd.f32 0.0, %v256
      %258 = vdwg.mxu0
      %v260 = vcombine.high %v172, %v172
      %v262 = vsel %vm179, %v171, 0
      %v264 = vsel %vm183, %v172, 0
      %v266 = vsel %vm183, %v260, 0
      %268 = vmatprep.subr.mxu0 %v266
      %269 = vmatpush1.msra.mxu0 %v264
      %270 = vmatprep.subr.mxu0 0.0
      %271 = vmatpush1.msra.mxu0 0.0
      %272 = vmatprep.subr.mxu0 0.0
      %273 = vmatpush1.msra.mxu0 0.0
      %274 = vmatprep.subr.mxu0 0.0
      %275 = vmatpush1.msra.mxu0 0.0
      %276 = vmatprep.subr.mxu0 0.0
      %277 = vmatpush1.msra.mxu0 0.0
      %278 = vmatprep.subr.mxu0 0.0
      %279 = vmatpush1.msra.mxu0 0.0
      %280 = vmatprep.subr.mxu0 0.0
      %281 = vmatpush1.msra.mxu0 0.0
      %282 = vmatprep.subr.mxu0 0.0
      %283 = vmatpush1.msra.mxu0 0.0
      %284 = vmatprep.subr.mxu0 0.0
      %285 = vmatpush1.msra.mxu0 0.0
      %286 = vmatprep.subr.mxu0 0.0
      %287 = vmatpush1.msra.mxu0 0.0
      %288 = vmatprep.subr.mxu0 0.0
      %289 = vmatpush1.msra.mxu0 0.0
      %290 = vmatprep.subr.mxu0 0.0
      %291 = vmatpush1.msra.mxu0 0.0
      %292 = vmatprep.subr.mxu0 0.0
      %293 = vmatpush1.msra.mxu0 0.0
      %294 = vmatprep.subr.mxu0 0.0
      %295 = vmatpush1.msra.mxu0 0.0
      %296 = vmatprep.subr.mxu0 0.0
      %297 = vmatpush1.msra.mxu0 0.0
      %298 = vmatprep.subr.mxu0 0.0
      %299 = vmatpush1.msra.mxu0 0.0
      %300 = vmatprep.subr.mxu0 0.0
      %301 = vmatpush1.msra.mxu0 0.0
      %302 = vmatprep.subr.mxu0 0.0
      %303 = vmatpush1.msra.mxu0 0.0
      %304 = vmatprep.subr.mxu0 0.0
      %305 = vmatpush1.msra.mxu0 0.0
      %306 = vmatprep.subr.mxu0 0.0
      %307 = vmatpush1.msra.mxu0 0.0
      %308 = vmatprep.subr.mxu0 0.0
      %309 = vmatpush1.msra.mxu0 0.0
      %310 = vmatprep.subr.mxu0 0.0
      %311 = vmatpush1.msra.mxu0 0.0
      %312 = vmatprep.subr.mxu0 0.0
      %313 = vmatpush1.msra.mxu0 0.0
      %314 = vmatprep.subr.mxu0 0.0
      %315 = vmatpush1.msra.mxu0 0.0
      %316 = vmatprep.subr.mxu0 0.0
      %317 = vmatpush1.msra.mxu0 0.0
      %318 = vmatprep.subr.mxu0 0.0
      %319 = vmatpush1.msra.mxu0 0.0
      %320 = vmatprep.subr.mxu0 0.0
      %321 = vmatpush1.msra.mxu0 0.0
      %322 = vmatprep.subr.mxu0 0.0
      %323 = vmatpush1.msra.mxu0 0.0
      %324 = vmatprep.subr.mxu0 0.0
      %325 = vmatpush1.msra.mxu0 0.0
      %326 = vmatprep.subr.mxu0 0.0
      %327 = vmatpush1.msra.mxu0 0.0
      %328 = vmatprep.subr.mxu0 0.0
      %329 = vmatpush1.msra.mxu0 0.0
      %330 = vmatprep.subr.mxu0 0.0
      %331 = vmatpush1.msra.mxu0 0.0
      %332 = vmatprep.mubr.f32.mxu0 0.0
      %333 = vmatmul.mubr.f32.gmra.mrb[0].mxu0 %v262
      %v334 = vpop.f32.mrb[0].mxu0
      %v335 = vadd.f32 %v255, %v334
      %v336 = vpop.f32.mrb[0].mxu0
      %v337 = vadd.f32 %v257, %v336
      %338 = vdwg.mxu0
      %s339 = scalar_lea.vmem %s1, 8
      %v340 = vld [vmem:[%s339] sm:$0xf]
      %s341 = scalar_lea.vmem %s165, 16
      %v342 = vld [vmem:[%s341] sm:$0xff]
      %v344 = vcombine.high %v342, %v342
      %v346 = vsel %vm179, %v340, 0
      %v348 = vsel %vm183, %v342, 0
      %v350 = vsel %vm183, %v344, 0
      %352 = vmatprep.subr.mxu0 %v350
      %353 = vmatpush1.msra.mxu0 %v348
      %354 = vmatprep.subr.mxu0 0.0
      %355 = vmatpush1.msra.mxu0 0.0
      %356 = vmatprep.subr.mxu0 0.0
      %357 = vmatpush1.msra.mxu0 0.0
      %358 = vmatprep.subr.mxu0 0.0
      %359 = vmatpush1.msra.mxu0 0.0
      %360 = vmatprep.subr.mxu0 0.0
      %361 = vmatpush1.msra.mxu0 0.0
      %362 = vmatprep.subr.mxu0 0.0
      %363 = vmatpush1.msra.mxu0 0.0
      %364 = vmatprep.subr.mxu0 0.0
      %365 = vmatpush1.msra.mxu0 0.0
      %366 = vmatprep.subr.mxu0 0.0
      %367 = vmatpush1.msra.mxu0 0.0
      %368 = vmatprep.subr.mxu0 0.0
      %369 = vmatpush1.msra.mxu0 0.0
      %370 = vmatprep.subr.mxu0 0.0
      %371 = vmatpush1.msra.mxu0 0.0
      %372 = vmatprep.subr.mxu0 0.0
      %373 = vmatpush1.msra.mxu0 0.0
      %374 = vmatprep.subr.mxu0 0.0
      %375 = vmatpush1.msra.mxu0 0.0
      %376 = vmatprep.subr.mxu0 0.0
      %377 = vmatpush1.msra.mxu0 0.0
      %378 = vmatprep.subr.mxu0 0.0
      %379 = vmatpush1.msra.mxu0 0.0
      %380 = vmatprep.subr.mxu0 0.0
      %381 = vmatpush1.msra.mxu0 0.0
      %382 = vmatprep.subr.mxu0 0.0
      %383 = vmatpush1.msra.mxu0 0.0
      %384 = vmatprep.subr.mxu0 0.0
      %385 = vmatpush1.msra.mxu0 0.0
      %386 = vmatprep.subr.mxu0 0.0
      %387 = vmatpush1.msra.mxu0 0.0
      %388 = vmatprep.subr.mxu0 0.0
      %389 = vmatpush1.msra.mxu0 0.0
      %390 = vmatprep.subr.mxu0 0.0
      %391 = vmatpush1.msra.mxu0 0.0
      %392 = vmatprep.subr.mxu0 0.0
      %393 = vmatpush1.msra.mxu0 0.0
      %394 = vmatprep.subr.mxu0 0.0
      %395 = vmatpush1.msra.mxu0 0.0
      %396 = vmatprep.subr.mxu0 0.0
      %397 = vmatpush1.msra.mxu0 0.0
      %398 = vmatprep.subr.mxu0 0.0
      %399 = vmatpush1.msra.mxu0 0.0
      %400 = vmatprep.subr.mxu0 0.0
      %401 = vmatpush1.msra.mxu0 0.0
      %402 = vmatprep.subr.mxu0 0.0
      %403 = vmatpush1.msra.mxu0 0.0
      %404 = vmatprep.subr.mxu0 0.0
      %405 = vmatpush1.msra.mxu0 0.0
      %406 = vmatprep.subr.mxu0 0.0
      %407 = vmatpush1.msra.mxu0 0.0
      %408 = vmatprep.subr.mxu0 0.0
      %409 = vmatpush1.msra.mxu0 0.0
      %410 = vmatprep.subr.mxu0 0.0
      %411 = vmatpush1.msra.mxu0 0.0
      %412 = vmatprep.subr.mxu0 0.0
      %413 = vmatpush1.msra.mxu0 0.0
      %414 = vmatprep.subr.mxu0 0.0
      %415 = vmatpush1.msra.mxu0 0.0
      %416 = vmatprep.mubr.f32.mxu0 0.0
      %417 = vmatmul.mubr.f32.gmra.mrb[0].mxu0 %v346
      %v418 = vpop.f32.mrb[0].mxu0
      %v419 = vadd.f32 0.0, %v418
      %v420 = vpop.f32.mrb[0].mxu0
      %v421 = vadd.f32 0.0, %v420
      %422 = vdwg.mxu0
      %v423 = vadd.f32 %v335, %v419
      %v424 = vadd.f32 %v337, %v421
      %s425 = scalar_lea.vmem %s1, 12
      %v426 = vld [vmem:[%s425] sm:$0xf]
      %s427 = scalar_lea.vmem %s165, 24
      %v428 = vld [vmem:[%s427] sm:$0xff]
      %v430 = vcombine.high %v428, %v428
      %v432 = vsel %vm179, %v426, 0
      %v434 = vsel %vm183, %v428, 0
      %v436 = vsel %vm183, %v430, 0
      %438 = vmatprep.subr.mxu0 %v436
      %439 = vmatpush1.msra.mxu0 %v434
      %440 = vmatprep.subr.mxu0 0.0
      %441 = vmatpush1.msra.mxu0 0.0
      %442 = vmatprep.subr.mxu0 0.0
      %443 = vmatpush1.msra.mxu0 0.0
      %444 = vmatprep.subr.mxu0 0.0
      %445 = vmatpush1.msra.mxu0 0.0
      %446 = vmatprep.subr.mxu0 0.0
      %447 = vmatpush1.msra.mxu0 0.0
      %448 = vmatprep.subr.mxu0 0.0
      %449 = vmatpush1.msra.mxu0 0.0
      %450 = vmatprep.subr.mxu0 0.0
      %451 = vmatpush1.msra.mxu0 0.0
      %452 = vmatprep.subr.mxu0 0.0
      %453 = vmatpush1.msra.mxu0 0.0
      %454 = vmatprep.subr.mxu0 0.0
      %455 = vmatpush1.msra.mxu0 0.0
      %456 = vmatprep.subr.mxu0 0.0
      %457 = vmatpush1.msra.mxu0 0.0
      %458 = vmatprep.subr.mxu0 0.0
      %459 = vmatpush1.msra.mxu0 0.0
      %460 = vmatprep.subr.mxu0 0.0
      %461 = vmatpush1.msra.mxu0 0.0
      %462 = vmatprep.subr.mxu0 0.0
      %463 = vmatpush1.msra.mxu0 0.0
      %464 = vmatprep.subr.mxu0 0.0
      %465 = vmatpush1.msra.mxu0 0.0
      %466 = vmatprep.subr.mxu0 0.0
      %467 = vmatpush1.msra.mxu0 0.0
      %468 = vmatprep.subr.mxu0 0.0
      %469 = vmatpush1.msra.mxu0 0.0
      %470 = vmatprep.subr.mxu0 0.0
      %471 = vmatpush1.msra.mxu0 0.0
      %472 = vmatprep.subr.mxu0 0.0
      %473 = vmatpush1.msra.mxu0 0.0
      %474 = vmatprep.subr.mxu0 0.0
      %475 = vmatpush1.msra.mxu0 0.0
      %476 = vmatprep.subr.mxu0 0.0
      %477 = vmatpush1.msra.mxu0 0.0
      %478 = vmatprep.subr.mxu0 0.0
      %479 = vmatpush1.msra.mxu0 0.0
      %480 = vmatprep.subr.mxu0 0.0
      %481 = vmatpush1.msra.mxu0 0.0
      %482 = vmatprep.subr.mxu0 0.0
      %483 = vmatpush1.msra.mxu0 0.0
      %484 = vmatprep.subr.mxu0 0.0
      %485 = vmatpush1.msra.mxu0 0.0
      %486 = vmatprep.subr.mxu0 0.0
      %487 = vmatpush1.msra.mxu0 0.0
      %488 = vmatprep.subr.mxu0 0.0
      %489 = vmatpush1.msra.mxu0 0.0
      %490 = vmatprep.subr.mxu0 0.0
      %491 = vmatpush1.msra.mxu0 0.0
      %492 = vmatprep.subr.mxu0 0.0
      %493 = vmatpush1.msra.mxu0 0.0
      %494 = vmatprep.subr.mxu0 0.0
      %495 = vmatpush1.msra.mxu0 0.0
      %496 = vmatprep.subr.mxu0 0.0
      %497 = vmatpush1.msra.mxu0 0.0
      %498 = vmatprep.subr.mxu0 0.0
      %499 = vmatpush1.msra.mxu0 0.0
      %500 = vmatprep.subr.mxu0 0.0
      %501 = vmatpush1.msra.mxu0 0.0
      %502 = vmatprep.mubr.f32.mxu0 0.0
      %503 = vmatmul.mubr.f32.gmra.mrb[0].mxu0 %v432
      %v504 = vpop.f32.mrb[0].mxu0
      %v505 = vadd.f32 0.0, %v504
      %v506 = vpop.f32.mrb[0].mxu0
      %v507 = vadd.f32 0.0, %v506
      %508 = vdwg.mxu0
      %v509 = vadd.f32 %v423, %v505
      %v510 = vadd.f32 %v424, %v507
      %s511 = scalar_lea.vmem %s1, 16
      %v512 = vld [vmem:[%s511] sm:$0xf]
      %s513 = scalar_lea.vmem %s165, 32
      %v514 = vld [vmem:[%s513] sm:$0xff]
      %v516 = vcombine.high %v514, %v514
      %v518 = vsel %vm179, %v512, 0
      %v520 = vsel %vm183, %v514, 0
      %v522 = vsel %vm183, %v516, 0
      %524 = vmatprep.subr.mxu0 %v522
      %525 = vmatpush1.msra.mxu0 %v520
      %526 = vmatprep.subr.mxu0 0.0
      %527 = vmatpush1.msra.mxu0 0.0
      %528 = vmatprep.subr.mxu0 0.0
      %529 = vmatpush1.msra.mxu0 0.0
      %530 = vmatprep.subr.mxu0 0.0
      %531 = vmatpush1.msra.mxu0 0.0
      %532 = vmatprep.subr.mxu0 0.0
      %533 = vmatpush1.msra.mxu0 0.0
      %534 = vmatprep.subr.mxu0 0.0
      %535 = vmatpush1.msra.mxu0 0.0
      %536 = vmatprep.subr.mxu0 0.0
      %537 = vmatpush1.msra.mxu0 0.0
      %538 = vmatprep.subr.mxu0 0.0
      %539 = vmatpush1.msra.mxu0 0.0
      %540 = vmatprep.subr.mxu0 0.0
      %541 = vmatpush1.msra.mxu0 0.0
      %542 = vmatprep.subr.mxu0 0.0
      %543 = vmatpush1.msra.mxu0 0.0
      %544 = vmatprep.subr.mxu0 0.0
      %545 = vmatpush1.msra.mxu0 0.0
      %546 = vmatprep.subr.mxu0 0.0
      %547 = vmatpush1.msra.mxu0 0.0
      %548 = vmatprep.subr.mxu0 0.0
      %549 = vmatpush1.msra.mxu0 0.0
      %550 = vmatprep.subr.mxu0 0.0
      %551 = vmatpush1.msra.mxu0 0.0
      %552 = vmatprep.subr.mxu0 0.0
      %553 = vmatpush1.msra.mxu0 0.0
      %554 = vmatprep.subr.mxu0 0.0
      %555 = vmatpush1.msra.mxu0 0.0
      %556 = vmatprep.subr.mxu0 0.0
      %557 = vmatpush1.msra.mxu0 0.0
      %558 = vmatprep.subr.mxu0 0.0
      %559 = vmatpush1.msra.mxu0 0.0
      %560 = vmatprep.subr.mxu0 0.0
      %561 = vmatpush1.msra.mxu0 0.0
      %562 = vmatprep.subr.mxu0 0.0
      %563 = vmatpush1.msra.mxu0 0.0
      %564 = vmatprep.subr.mxu0 0.0
      %565 = vmatpush1.msra.mxu0 0.0
      %566 = vmatprep.subr.mxu0 0.0
      %567 = vmatpush1.msra.mxu0 0.0
      %568 = vmatprep.subr.mxu0 0.0
      %569 = vmatpush1.msra.mxu0 0.0
      %570 = vmatprep.subr.mxu0 0.0
      %571 = vmatpush1.msra.mxu0 0.0
      %572 = vmatprep.subr.mxu0 0.0
      %573 = vmatpush1.msra.mxu0 0.0
      %574 = vmatprep.subr.mxu0 0.0
      %575 = vmatpush1.msra.mxu0 0.0
      %576 = vmatprep.subr.mxu0 0.0
      %577 = vmatpush1.msra.mxu0 0.0
      %578 = vmatprep.subr.mxu0 0.0
      %579 = vmatpush1.msra.mxu0 0.0
      %580 = vmatprep.subr.mxu0 0.0
      %581 = vmatpush1.msra.mxu0 0.0
      %582 = vmatprep.subr.mxu0 0.0
      %583 = vmatpush1.msra.mxu0 0.0
      %584 = vmatprep.subr.mxu0 0.0
      %585 = vmatpush1.msra.mxu0 0.0
      %586 = vmatprep.subr.mxu0 0.0
      %587 = vmatpush1.msra.mxu0 0.0
      %588 = vmatprep.mubr.f32.mxu0 0.0
      %589 = vmatmul.mubr.f32.gmra.mrb[0].mxu0 %v518
      %v590 = vpop.f32.mrb[0].mxu0
      %v591 = vadd.f32 0.0, %v590
      %v592 = vpop.f32.mrb[0].mxu0
      %v593 = vadd.f32 0.0, %v592
      %594 = vdwg.mxu0
      %v595 = vadd.f32 %v509, %v591
      %v596 = vadd.f32 %v510, %v593
      %s597 = scalar_lea.vmem %s1, 20
      %v598 = vld [vmem:[%s597] sm:$0xf]
      %s599 = scalar_lea.vmem %s165, 40
      %v600 = vld [vmem:[%s599] sm:$0xff]
      %v602 = vcombine.high %v600, %v600
      %v604 = vsel %vm179, %v598, 0
      %v606 = vsel %vm183, %v600, 0
      %v608 = vsel %vm183, %v602, 0
      %610 = vmatprep.subr.mxu0 %v608
      %611 = vmatpush1.msra.mxu0 %v606
      %612 = vmatprep.subr.mxu0 0.0
      %613 = vmatpush1.msra.mxu0 0.0
      %614 = vmatprep.subr.mxu0 0.0
      %615 = vmatpush1.msra.mxu0 0.0
      %616 = vmatprep.subr.mxu0 0.0
      %617 = vmatpush1.msra.mxu0 0.0
      %618 = vmatprep.subr.mxu0 0.0
      %619 = vmatpush1.msra.mxu0 0.0
      %620 = vmatprep.subr.mxu0 0.0
      %621 = vmatpush1.msra.mxu0 0.0
      %622 = vmatprep.subr.mxu0 0.0
      %623 = vmatpush1.msra.mxu0 0.0
      %624 = vmatprep.subr.mxu0 0.0
      %625 = vmatpush1.msra.mxu0 0.0
      %626 = vmatprep.subr.mxu0 0.0
      %627 = vmatpush1.msra.mxu0 0.0
      %628 = vmatprep.subr.mxu0 0.0
      %629 = vmatpush1.msra.mxu0 0.0
      %630 = vmatprep.subr.mxu0 0.0
      %631 = vmatpush1.msra.mxu0 0.0
      %632 = vmatprep.subr.mxu0 0.0
      %633 = vmatpush1.msra.mxu0 0.0
      %634 = vmatprep.subr.mxu0 0.0
      %635 = vmatpush1.msra.mxu0 0.0
      %636 = vmatprep.subr.mxu0 0.0
      %637 = vmatpush1.msra.mxu0 0.0
      %638 = vmatprep.subr.mxu0 0.0
      %639 = vmatpush1.msra.mxu0 0.0
      %640 = vmatprep.subr.mxu0 0.0
      %641 = vmatpush1.msra.mxu0 0.0
      %642 = vmatprep.subr.mxu0 0.0
      %643 = vmatpush1.msra.mxu0 0.0
      %644 = vmatprep.subr.mxu0 0.0
      %645 = vmatpush1.msra.mxu0 0.0
      %646 = vmatprep.subr.mxu0 0.0
      %647 = vmatpush1.msra.mxu0 0.0
      %648 = vmatprep.subr.mxu0 0.0
      %649 = vmatpush1.msra.mxu0 0.0
      %650 = vmatprep.subr.mxu0 0.0
      %651 = vmatpush1.msra.mxu0 0.0
      %652 = vmatprep.subr.mxu0 0.0
      %653 = vmatpush1.msra.mxu0 0.0
      %654 = vmatprep.subr.mxu0 0.0
      %655 = vmatpush1.msra.mxu0 0.0
      %656 = vmatprep.subr.mxu0 0.0
      %657 = vmatpush1.msra.mxu0 0.0
      %658 = vmatprep.subr.mxu0 0.0
      %659 = vmatpush1.msra.mxu0 0.0
      %660 = vmatprep.subr.mxu0 0.0
      %661 = vmatpush1.msra.mxu0 0.0
      %662 = vmatprep.subr.mxu0 0.0
      %663 = vmatpush1.msra.mxu0 0.0
      %664 = vmatprep.subr.mxu0 0.0
      %665 = vmatpush1.msra.mxu0 0.0
      %666 = vmatprep.subr.mxu0 0.0
      %667 = vmatpush1.msra.mxu0 0.0
      %668 = vmatprep.subr.mxu0 0.0
      %669 = vmatpush1.msra.mxu0 0.0
      %670 = vmatprep.subr.mxu0 0.0
      %671 = vmatpush1.msra.mxu0 0.0
      %672 = vmatprep.subr.mxu0 0.0
      %673 = vmatpush1.msra.mxu0 0.0
      %674 = vmatprep.mubr.f32.mxu0 0.0
      %675 = vmatmul.mubr.f32.gmra.mrb[0].mxu0 %v604
      %v676 = vpop.f32.mrb[0].mxu0
      %v677 = vadd.f32 0.0, %v676
      %v678 = vpop.f32.mrb[0].mxu0
      %v679 = vadd.f32 0.0, %v678
      %680 = vdwg.mxu0
      %v681 = vadd.f32 %v595, %v677
      %v682 = vadd.f32 %v596, %v679
      %s683 = scalar_lea.vmem %s1, 24
      %v684 = vld [vmem:[%s683] sm:$0xf]
      %s685 = scalar_lea.vmem %s165, 48
      %v686 = vld [vmem:[%s685] sm:$0xff]
      %v688 = vcombine.high %v686, %v686
      %v690 = vsel %vm179, %v684, 0
      %v692 = vsel %vm183, %v686, 0
      %v694 = vsel %vm183, %v688, 0
      %696 = vmatprep.subr.mxu0 %v694
      %697 = vmatpush1.msra.mxu0 %v692
      %698 = vmatprep.subr.mxu0 0.0
      %699 = vmatpush1.msra.mxu0 0.0
      %700 = vmatprep.subr.mxu0 0.0
      %701 = vmatpush1.msra.mxu0 0.0
      %702 = vmatprep.subr.mxu0 0.0
      %703 = vmatpush1.msra.mxu0 0.0
      %704 = vmatprep.subr.mxu0 0.0
      %705 = vmatpush1.msra.mxu0 0.0
      %706 = vmatprep.subr.mxu0 0.0
      %707 = vmatpush1.msra.mxu0 0.0
      %708 = vmatprep.subr.mxu0 0.0
      %709 = vmatpush1.msra.mxu0 0.0
      %710 = vmatprep.subr.mxu0 0.0
      %711 = vmatpush1.msra.mxu0 0.0
      %712 = vmatprep.subr.mxu0 0.0
      %713 = vmatpush1.msra.mxu0 0.0
      %714 = vmatprep.subr.mxu0 0.0
      %715 = vmatpush1.msra.mxu0 0.0
      %716 = vmatprep.subr.mxu0 0.0
      %717 = vmatpush1.msra.mxu0 0.0
      %718 = vmatprep.subr.mxu0 0.0
      %719 = vmatpush1.msra.mxu0 0.0
      %720 = vmatprep.subr.mxu0 0.0
      %721 = vmatpush1.msra.mxu0 0.0
      %722 = vmatprep.subr.mxu0 0.0
      %723 = vmatpush1.msra.mxu0 0.0
      %724 = vmatprep.subr.mxu0 0.0
      %725 = vmatpush1.msra.mxu0 0.0
      %726 = vmatprep.subr.mxu0 0.0
      %727 = vmatpush1.msra.mxu0 0.0
      %728 = vmatprep.subr.mxu0 0.0
      %729 = vmatpush1.msra.mxu0 0.0
      %730 = vmatprep.subr.mxu0 0.0
      %731 = vmatpush1.msra.mxu0 0.0
      %732 = vmatprep.subr.mxu0 0.0
      %733 = vmatpush1.msra.mxu0 0.0
      %734 = vmatprep.subr.mxu0 0.0
      %735 = vmatpush1.msra.mxu0 0.0
      %736 = vmatprep.subr.mxu0 0.0
      %737 = vmatpush1.msra.mxu0 0.0
      %738 = vmatprep.subr.mxu0 0.0
      %739 = vmatpush1.msra.mxu0 0.0
      %740 = vmatprep.subr.mxu0 0.0
      %741 = vmatpush1.msra.mxu0 0.0
      %742 = vmatprep.subr.mxu0 0.0
      %743 = vmatpush1.msra.mxu0 0.0
      %744 = vmatprep.subr.mxu0 0.0
      %745 = vmatpush1.msra.mxu0 0.0
      %746 = vmatprep.subr.mxu0 0.0
      %747 = vmatpush1.msra.mxu0 0.0
      %748 = vmatprep.subr.mxu0 0.0
      %749 = vmatpush1.msra.mxu0 0.0
      %750 = vmatprep.subr.mxu0 0.0
      %751 = vmatpush1.msra.mxu0 0.0
      %752 = vmatprep.subr.mxu0 0.0
      %753 = vmatpush1.msra.mxu0 0.0
      %754 = vmatprep.subr.mxu0 0.0
      %755 = vmatpush1.msra.mxu0 0.0
      %756 = vmatprep.subr.mxu0 0.0
      %757 = vmatpush1.msra.mxu0 0.0
      %758 = vmatprep.subr.mxu0 0.0
      %759 = vmatpush1.msra.mxu0 0.0
      %760 = vmatprep.mubr.f32.mxu0 0.0
      %761 = vmatmul.mubr.f32.gmra.mrb[0].mxu0 %v690
      %v762 = vpop.f32.mrb[0].mxu0
      %v763 = vadd.f32 0.0, %v762
      %v764 = vpop.f32.mrb[0].mxu0
      %v765 = vadd.f32 0.0, %v764
      %766 = vdwg.mxu0
      %v767 = vadd.f32 %v681, %v763
      %v768 = vadd.f32 %v682, %v765
      %s769 = scalar_lea.vmem %s1, 28
      %v770 = vld [vmem:[%s769] sm:$0xf]
      %s771 = scalar_lea.vmem %s165, 56
      %v772 = vld [vmem:[%s771] sm:$0xff]
      %v774 = vcombine.high %v772, %v772
      %v776 = vsel %vm179, %v770, 0
      %v778 = vsel %vm183, %v772, 0
      %v780 = vsel %vm183, %v774, 0
      %782 = vmatprep.subr.mxu0 %v780
      %783 = vmatpush1.msra.mxu0 %v778
      %784 = vmatprep.subr.mxu0 0.0
      %785 = vmatpush1.msra.mxu0 0.0
      %786 = vmatprep.subr.mxu0 0.0
      %787 = vmatpush1.msra.mxu0 0.0
      %788 = vmatprep.subr.mxu0 0.0
      %789 = vmatpush1.msra.mxu0 0.0
      %790 = vmatprep.subr.mxu0 0.0
      %791 = vmatpush1.msra.mxu0 0.0
      %792 = vmatprep.subr.mxu0 0.0
      %793 = vmatpush1.msra.mxu0 0.0
      %794 = vmatprep.subr.mxu0 0.0
      %795 = vmatpush1.msra.mxu0 0.0
      %796 = vmatprep.subr.mxu0 0.0
      %797 = vmatpush1.msra.mxu0 0.0
      %798 = vmatprep.subr.mxu0 0.0
      %799 = vmatpush1.msra.mxu0 0.0
      %800 = vmatprep.subr.mxu0 0.0
      %801 = vmatpush1.msra.mxu0 0.0
      %802 = vmatprep.subr.mxu0 0.0
      %803 = vmatpush1.msra.mxu0 0.0
      %804 = vmatprep.subr.mxu0 0.0
      %805 = vmatpush1.msra.mxu0 0.0
      %806 = vmatprep.subr.mxu0 0.0
      %807 = vmatpush1.msra.mxu0 0.0
      %808 = vmatprep.subr.mxu0 0.0
      %809 = vmatpush1.msra.mxu0 0.0
      %810 = vmatprep.subr.mxu0 0.0
      %811 = vmatpush1.msra.mxu0 0.0
      %812 = vmatprep.subr.mxu0 0.0
      %813 = vmatpush1.msra.mxu0 0.0
      %814 = vmatprep.subr.mxu0 0.0
      %815 = vmatpush1.msra.mxu0 0.0
      %816 = vmatprep.subr.mxu0 0.0
      %817 = vmatpush1.msra.mxu0 0.0
      %818 = vmatprep.subr.mxu0 0.0
      %819 = vmatpush1.msra.mxu0 0.0
      %820 = vmatprep.subr.mxu0 0.0
      %821 = vmatpush1.msra.mxu0 0.0
      %822 = vmatprep.subr.mxu0 0.0
      %823 = vmatpush1.msra.mxu0 0.0
      %824 = vmatprep.subr.mxu0 0.0
      %825 = vmatpush1.msra.mxu0 0.0
      %826 = vmatprep.subr.mxu0 0.0
      %827 = vmatpush1.msra.mxu0 0.0
      %828 = vmatprep.subr.mxu0 0.0
      %829 = vmatpush1.msra.mxu0 0.0
      %830 = vmatprep.subr.mxu0 0.0
      %831 = vmatpush1.msra.mxu0 0.0
      %832 = vmatprep.subr.mxu0 0.0
      %833 = vmatpush1.msra.mxu0 0.0
      %834 = vmatprep.subr.mxu0 0.0
      %835 = vmatpush1.msra.mxu0 0.0
      %836 = vmatprep.subr.mxu0 0.0
      %837 = vmatpush1.msra.mxu0 0.0
      %838 = vmatprep.subr.mxu0 0.0
      %839 = vmatpush1.msra.mxu0 0.0
      %840 = vmatprep.subr.mxu0 0.0
      %841 = vmatpush1.msra.mxu0 0.0
      %842 = vmatprep.subr.mxu0 0.0
      %843 = vmatpush1.msra.mxu0 0.0
      %844 = vmatprep.subr.mxu0 0.0
      %845 = vmatpush1.msra.mxu0 0.0
      %846 = vmatprep.mubr.f32.mxu0 0.0
      %847 = vmatmul.mubr.f32.gmra.mrb[0].mxu0 %v776
      %v848 = vpop.f32.mrb[0].mxu0
      %v849 = vadd.f32 0.0, %v848
      %v850 = vpop.f32.mrb[0].mxu0
      %v851 = vadd.f32 0.0, %v850
      %852 = vdwg.mxu0
      %v853 = vadd.f32 %v767, %v849
      %v854 = vadd.f32 %v768, %v851
      %s855 = scalar_lea.vmem %s1, 32
      %v856 = vld [vmem:[%s855] sm:$0xf]
      %s857 = scalar_lea.vmem %s165, 64
      %v858 = vld [vmem:[%s857] sm:$0xff]
      %v860 = vcombine.high %v858, %v858
      %v862 = vsel %vm179, %v856, 0
      %v864 = vsel %vm183, %v858, 0
      %v866 = vsel %vm183, %v860, 0
      %868 = vmatprep.subr.mxu0 %v866
      %869 = vmatpush1.msra.mxu0 %v864
      %870 = vmatprep.subr.mxu0 0.0
      %871 = vmatpush1.msra.mxu0 0.0
      %872 = vmatprep.subr.mxu0 0.0
      %873 = vmatpush1.msra.mxu0 0.0
      %874 = vmatprep.subr.mxu0 0.0
      %875 = vmatpush1.msra.mxu0 0.0
      %876 = vmatprep.subr.mxu0 0.0
      %877 = vmatpush1.msra.mxu0 0.0
      %878 = vmatprep.subr.mxu0 0.0
      %879 = vmatpush1.msra.mxu0 0.0
      %880 = vmatprep.subr.mxu0 0.0
      %881 = vmatpush1.msra.mxu0 0.0
      %882 = vmatprep.subr.mxu0 0.0
      %883 = vmatpush1.msra.mxu0 0.0
      %884 = vmatprep.subr.mxu0 0.0
      %885 = vmatpush1.msra.mxu0 0.0
      %886 = vmatprep.subr.mxu0 0.0
      %887 = vmatpush1.msra.mxu0 0.0
      %888 = vmatprep.subr.mxu0 0.0
      %889 = vmatpush1.msra.mxu0 0.0
      %890 = vmatprep.subr.mxu0 0.0
      %891 = vmatpush1.msra.mxu0 0.0
      %892 = vmatprep.subr.mxu0 0.0
      %893 = vmatpush1.msra.mxu0 0.0
      %894 = vmatprep.subr.mxu0 0.0
      %895 = vmatpush1.msra.mxu0 0.0
      %896 = vmatprep.subr.mxu0 0.0
      %897 = vmatpush1.msra.mxu0 0.0
      %898 = vmatprep.subr.mxu0 0.0
      %899 = vmatpush1.msra.mxu0 0.0
      %900 = vmatprep.subr.mxu0 0.0
      %901 = vmatpush1.msra.mxu0 0.0
      %902 = vmatprep.subr.mxu0 0.0
      %903 = vmatpush1.msra.mxu0 0.0
      %904 = vmatprep.subr.mxu0 0.0
      %905 = vmatpush1.msra.mxu0 0.0
      %906 = vmatprep.subr.mxu0 0.0
      %907 = vmatpush1.msra.mxu0 0.0
      %908 = vmatprep.subr.mxu0 0.0
      %909 = vmatpush1.msra.mxu0 0.0
      %910 = vmatprep.subr.mxu0 0.0
      %911 = vmatpush1.msra.mxu0 0.0
      %912 = vmatprep.subr.mxu0 0.0
      %913 = vmatpush1.msra.mxu0 0.0
      %914 = vmatprep.subr.mxu0 0.0
      %915 = vmatpush1.msra.mxu0 0.0
      %916 = vmatprep.subr.mxu0 0.0
      %917 = vmatpush1.msra.mxu0 0.0
      %918 = vmatprep.subr.mxu0 0.0
      %919 = vmatpush1.msra.mxu0 0.0
      %920 = vmatprep.subr.mxu0 0.0
      %921 = vmatpush1.msra.mxu0 0.0
      %922 = vmatprep.subr.mxu0 0.0
      %923 = vmatpush1.msra.mxu0 0.0
      %924 = vmatprep.subr.mxu0 0.0
      %925 = vmatpush1.msra.mxu0 0.0
      %926 = vmatprep.subr.mxu0 0.0
      %927 = vmatpush1.msra.mxu0 0.0
      %928 = vmatprep.subr.mxu0 0.0
      %929 = vmatpush1.msra.mxu0 0.0
      %930 = vmatprep.subr.mxu0 0.0
      %931 = vmatpush1.msra.mxu0 0.0
      %932 = vmatprep.mubr.f32.mxu0 0.0
      %933 = vmatmul.mubr.f32.gmra.mrb[0].mxu0 %v862
      %v934 = vpop.f32.mrb[0].mxu0
      %v935 = vadd.f32 0.0, %v934
      %v936 = vpop.f32.mrb[0].mxu0
      %v937 = vadd.f32 0.0, %v936
      %938 = vdwg.mxu0
      %v939 = vadd.f32 %v853, %v935
      %v940 = vadd.f32 %v854, %v937
      %v941 = vld [vmem:[%s2] sm:$0xf]
      %943 = vset.pattern.permute.xlu0 0
      %944 = vperm.xlu0 %943, %v941
      %v945 = vpop.permute.xlu0 %944
      %v947 = vadd.f32 %v939, %v945
      %v948 = vadd.f32 %v940, %v945
      %v951 = vcombine.low %v947, %v948
      %953 = vst [vmem:[%s170] sm:$0xff] %v951
      %p954 = scmp.lt.s32.totalorder %s14, 1
      %s955 = scalar_select %p954, %s14, 1
      %s956 = smul.addr %s955, 2
      %s957 = smul.addr %s956, 4
      %s958 = scalar_lea.vmem %s3, %s957
      // Predicated region
      $region33: #{residual_pooling_block.7} parent=31 // pred_check
        %p959 = pneg %p100
      $region34: #{residual_pooling_block.7} parent=31 // pred_check_branch
        %961 = sbr.rel (%p959) target = $region36
      $region35: #{residual_pooling_block.7} parent=31 // pred_region
        _
      $region36: #{residual_pooling_block.7} parent=31 // pred_fallthru
        _
    $region32: #{residual_pooling_block.7} parent=5 // pred_fallthru
      _
    %p962 = scmp.le.s32.totalorder 2, %s9
    // Predicated region
    $region37: #{residual_pooling_block.7} parent=5 // pred_check
      %p963 = pneg %p962
    $region38: #{residual_pooling_block.7} parent=5 // pred_check_branch
      %965 = sbr.rel (%p963) target = $region40
    $region39: #{residual_pooling_block.7} parent=5 // pred_region
      %s966 = ssub.s32 %s9, 2
      // Predicated region
      $region41: #{residual_pooling_block.7} parent=39 // pred_check
        %p967 = pneg %p106
      $region42: #{residual_pooling_block.7} parent=39 // pred_check_branch
        %969 = sbr.rel (%p967) target = $region44
      $region43: #{residual_pooling_block.7} parent=39 // pred_region
        %p970 = scmp.lt.s32.totalorder %s15, 1
        %s971 = scalar_select %p970, %s15, 1
        %s972 = smul.addr %s971, 2
        %s973 = smul.addr %s972, 4
        %s974 = scalar_lea.vmem %s3, %s973
      $region44: #{residual_pooling_block.7} parent=39 // pred_fallthru
        _
    $region40: #{residual_pooling_block.7} parent=5 // pred_fallthru
      _
  $region6: #{residual_pooling_block.7} parent=0 // loop_footer
    %s13 = sadd.s32 1, %s9
  $region7: #{residual_pooling_block.7} parent=0 // loop_footer_branch
    %8 = sbr.rel target = $region3
  $region8: #{residual_pooling_block.7} parent=0 // loop_exit
    _

</llo_original>
